<compile_context>
chip_gen: v5e
topology: v5e:2x2
jax: 0.10.0
libtpu: 0.0.40
codegen_flags: <defaults>
</compile_context>

<pallas_src>
import jax
import jax.numpy as jnp
from jax.experimental import pallas as pl
from jax.experimental.pallas import tpu as pltpu


def _round_up(n, m):
    return ((n + m - 1) // m) * m


def _pad2(a, rows, cols, dtype=None):
    """Zero-pad a 2D array to (rows, cols) and optionally cast."""
    out_dtype = a.dtype if dtype is None else dtype
    out = jnp.zeros((rows, cols), out_dtype)
    return out.at[: a.shape[0], : a.shape[1]].set(a.astype(out_dtype))


def _choose_tb(b_real, requested):
    """Pick the batch tile: as large as possible (<=256, <=B), but keep the
    grid >= 2 steps when the batch allows it so the 'parallel' axis can shard
    across both TensorCores on v7x."""
    cap = min(_round_up(max(requested, 16), 16), 256)
    tb = min(cap, _round_up(b_real, 16))
    if _round_up(b_real, tb) // tb < 2 and b_real > 16:
        tb = max(16, _round_up((b_real + 1) // 2, 16))
    return tb


def _make_dan_kernel(b_real, f_real, c_real, h_real, c_pad, n_slots):
    """Build the DAN loss kernel with the real (unpadded) sizes baked in."""
    NEG = -1e30

    def _lrelu(v):  # F.leaky_relu, negative_slope=0.01
        return jnp.where(v >= 0.0, v, 0.01 * v)

    def kernel(x_ref, tgt_ref, lsh_ref, lbl_ref,
               w11_ref, b11_ref, w12_ref, b12_ref,
               w21_ref, b21_ref, w22_ref, b22_ref,
               whead_ref, bhead_ref, loss_ref):
        tb, f_pad = x_ref.shape
        h_pad = lsh_ref.shape[1]

        x = x_ref[...]                                   # (TB, Fp) f32
        x_bf = x.astype(jnp.bfloat16)                    # MXU operand only
        tgt = tgt_ref[...]                               # (TB, Fp) f32
        lsh_t = lsh_ref[...]                             # (TB, Hp) f32

        def lin(act_f32, w_ref, b_ref):                  # bf16 MXU, f32 accum
            return jnp.dot(act_f32.astype(jnp.bfloat16), w_ref[...],
                           preferred_element_type=jnp.float32) + b_ref[...]

        # ---- residual MLP trunk (F.dropout(p=0.0) is the identity) ----
        # NOTE: trunk activations deliberately stay f32 (v5e has no bf16 VALU
        # and the residual adds / recon MSE are f32 in the PyTorch reference).
        h = _lrelu(jnp.dot(x_bf, w11_ref[...],
                           preferred_element_type=jnp.float32) + b11_ref[...])
        h = _lrelu(lin(h, w12_ref, b12_ref))
        sum1 = x + h
        g = _lrelu(lin(sum1, w21_ref, b21_ref))
        g = _lrelu(lin(g, w22_ref, b22_ref))
        out = g + sum1 + x                               # (TB, Fp) f32

        # ---- fused classification + hash heads (single MXU pass) ----
        head = lin(out, whead_ref, bhead_ref)            # (TB, Cp + Hp)
        cla = head[:, :c_pad]                            # (TB, Cp)
        lsh_out = jnp.tanh(head[:, c_pad:])              # (TB, Hp)

        # ---- compact masks: one (TB,1) row mask, (1,*) column masks ----
        row0 = pl.program_id(0) * tb
        rmask = (row0 + jax.lax.broadcasted_iota(jnp.int32, (tb, 1), 0)
                 ) < b_real                                        # (TB, 1)
        hmask = jax.lax.broadcasted_iota(jnp.int32, (1, h_pad), 1) < h_real
        cmask = jax.lax.broadcasted_iota(jnp.int32, (1, c_pad), 1) < c_real
        rmask_f = rmask.astype(jnp.float32)

        # Padded feature / hash columns contribute exactly 0 to the MSE sums
        # (weights and targets are zero-padded), so only the row mask applies.
        reg_sum = jnp.sum(jnp.where(rmask, (out - tgt) ** 2, 0.0),
                          keepdims=True)                           # (1, 1)
        lsh_sum = jnp.sum(jnp.where(rmask, (lsh_out - lsh_t) ** 2, 0.0),
                          keepdims=True)                           # (1, 1)

        # ---- MultiLabelMarginLoss from raw int32 labels ----
        # Pass 1 (unrolled over the J label slots): per-slot validity (slots
        # stop at the first -1), per-slot target score x_t, and the target-set
        # membership map.  Live working set is (TB, Cp) per slot.
        col_c = jax.lax.broadcasted_iota(jnp.int32, (1, c_pad), 1)  # (1, Cp)
        valid = rmask_f                                  # (TB,1) kills pad rows
        is_tgt = jnp.zeros((tb, c_pad), jnp.float32)
        x_ts, valids = [], []
        for jj in range(n_slots):
            lj = lbl_ref[:, jj:jj + 1]                   # (TB, 1) int32
            valid = valid * (lj >= 0).astype(jnp.float32)
            oh_j = jnp.where(col_c == lj, 1.0, 0.0) * valid        # (TB, Cp)
            is_tgt = jnp.maximum(is_tgt, oh_j)
            x_ts.append(jnp.sum(oh_j * cla, axis=1, keepdims=True))  # (TB,1)
            valids.append(valid)

        notgt = jnp.where(cmask, 1.0 - is_tgt, 0.0)                # (TB, Cp)

        # Pass 2: hinge margins against every non-target class.
        cla_sum = jnp.zeros((1, 1), jnp.float32)
        for jj in range(n_slots):
            marg = jnp.maximum(1.0 - x_ts[jj] + cla, 0.0)          # (TB, Cp)
            cla_sum = cla_sum + jnp.sum(marg * notgt * valids[jj],
                                        keepdims=True)

        # ---- KLDivLoss(log_softmax(lsh_out), softmax(lsh)), 'mean' ----
        lo_m = jnp.max(jnp.where(hmask, lsh_out, NEG), axis=1, keepdims=True)
        e_p = jnp.where(hmask, jnp.exp(lsh_out - lo_m), 0.0)
        lse = jnp.log(jnp.sum(e_p, axis=1, keepdims=True)) + lo_m
        logp = lsh_out - lse
        lt_m = jnp.max(jnp.where(hmask, lsh_t, NEG), axis=1, keepdims=True)
        e_q = jnp.where(hmask, jnp.exp(lsh_t - lt_m), 0.0)
        denom = jnp.sum(e_q, axis=1, keepdims=True)
        q = e_q / denom                                  # exact (review note)
        logq = (lsh_t - lt_m) - jnp.log(denom)
        kl_sum = jnp.sum(jnp.where(rmask & hmask, q * (logq - logp), 0.0),
                         keepdims=True)                            # (1, 1)

        # loss = mse_recon + multilabel_margin + mse_lsh - kl   (module spec)
        partial = (reg_sum / float(b_real * f_real)
                   + cla_sum / float(b_real * c_real)
                   + (lsh_sum - kl_sum) / float(b_real * h_real))
        loss_ref[...] = jnp.broadcast_to(partial, loss_ref.shape).astype(
            jnp.float32)

    return kernel


def dan_forward_loss(x, target_data, lsh, labels, params, *, batch_tile=256):
    """Replicates DAN.forward(x, target_data, lsh, labels) -> scalar loss."""
    b_real, f_real = x.shape
    h_real = lsh.shape[1]
    c_real = params["wcla"].shape[1]
    l_real = params["w11"].shape[1]
    j = labels.shape[1]            # MultiLabelMargin target slots

    f_pad = _round_up(f_real, 128)
    l_pad = _round_up(l_real, 128)
    c_pad = _round_up(c_real, 128)
    h_pad = _round_up(h_real, 128)
    tb = _choose_tb(b_real, batch_tile)
    b_pad = _round_up(b_real, tb)
    grid = (b_pad // tb,)

    # ---- activations / targets (all f32; bf16 cast happens at the MXU) ----
    x_p = _pad2(x, b_pad, f_pad, jnp.float32)
    tgt_p = _pad2(target_data, b_pad, f_pad, jnp.float32)
    lsh_p = _pad2(lsh, b_pad, h_pad, jnp.float32)

    # ---- labels: raw int32, -1 padded (one-hot is built in-kernel) ----
    # NOTE: labels must lie in [0, c_real); an out-of-range label yields an
    # all-zero one-hot row (slot silently skipped) instead of PyTorch's error.
    labels_p = jnp.full((b_pad, j), -1, jnp.int32)
    labels_p = labels_p.at[:b_real, :].set(labels.astype(jnp.int32))

    # ---- weights: zero-pad to lane-dense tiles; bf16 for the MXU ----
    w11 = _pad2(params["w11"], f_pad, l_pad, jnp.bfloat16)
    b11 = _pad2(params["b11"].reshape(1, -1), 1, l_pad, jnp.float32)
    w12 = _pad2(params["w12"], l_pad, f_pad, jnp.bfloat16)
    b12 = _pad2(params["b12"].reshape(1, -1), 1, f_pad, jnp.float32)
    w21 = _pad2(params["w21"], f_pad, l_pad, jnp.bfloat16)
    b21 = _pad2(params["b21"].reshape(1, -1), 1, l_pad, jnp.float32)
    w22 = _pad2(params["w22"], l_pad, f_pad, jnp.bfloat16)
    b22 = _pad2(params["b22"].reshape(1, -1), 1, f_pad, jnp.float32)
    # Fused heads: [cla | lsh], each sub-block 128-aligned so the kernel can
    # slice at lane-tile boundaries.
    whead = jnp.concatenate(
        [_pad2(params["wcla"], f_pad, c_pad, jnp.bfloat16),
         _pad2(params["wlsh"], f_pad, h_pad, jnp.bfloat16)], axis=1)
    bhead = jnp.concatenate(
        [_pad2(params["bcla"].reshape(1, -1), 1, c_pad, jnp.float32),
         _pad2(params["blsh"].reshape(1, -1), 1, h_pad, jnp.float32)], axis=1)

    inputs = (x_p, tgt_p, lsh_p, labels_p,
              w11, b11, w12, b12, w21, b21, w22, b22, whead, bhead)

    def batched(shape):      # tiled along the batch grid axis (double-buffered)
        return pl.BlockSpec(shape, lambda i: (i,) + (0,) * (len(shape) - 1))

    def resident(shape):     # constant block -> VMEM-resident, single-buffered
        return pl.BlockSpec(shape, lambda i: (0,) * len(shape),
                            pipeline_mode=pl.Buffered(1))

    in_specs = [
        batched((tb, f_pad)),                              # x (f32)
        batched((tb, f_pad)),                              # target_data
        batched((tb, h_pad)),                              # lsh
        batched((tb, j)),                                  # labels (int32)
        resident((f_pad, l_pad)), resident((1, l_pad)),    # fc1_1
        resident((l_pad, f_pad)), resident((1, f_pad)),    # fc1_2
        resident((f_pad, l_pad)), resident((1, l_pad)),    # fc2_1
        resident((l_pad, f_pad)), resident((1, f_pad)),    # fc2_2
        resident((f_pad, c_pad + h_pad)),                  # fused head W
        resident((1, c_pad + h_pad)),                      # fused head b
    ]
    out_specs = pl.BlockSpec((8, 128), lambda i: (i, 0))
    out_shape = jax.ShapeDtypeStruct((8 * grid[0], 128), jnp.float32)

    # ---- cost estimate (per full call) ----
    flops = int(8 * b_pad * f_pad * l_pad               # four trunk matmuls
                + 2 * b_pad * f_pad * (c_pad + h_pad))  # fused head matmul
    transcendentals = int(4 * b_pad * h_pad)            # tanh + exp/log chains
    bytes_accessed = int(sum(int(a.size) * a.dtype.itemsize for a in inputs)
                         + 8 * grid[0] * 128 * 4)

    # ---- VMEM budget: weights (single-buffered) + 2x batched tiles + slack,
    # floored at 8 MiB, capped below v7x's 64 MiB physical VMEM. ----
    weight_bytes = sum(int(a.size) * a.dtype.itemsize
                       for a in (w11, b11, w12, b12, w21, b21, w22, b22,
                                 whead, bhead))
    act_tile_bytes = 2 * tb * (2 * f_pad * 4 + h_pad * 4 + j * 4)
    live_bytes = tb * (6 * f_pad + 3 * c_pad + 6 * h_pad) * 4
    vmem_limit = int(min(48 << 20,
                         max(8 << 20,
                             2 * (weight_bytes + act_tile_bytes + live_bytes))))

    kernel = _make_dan_kernel(b_real, f_real, c_real, h_real, c_pad, j)

    partials = pl.pallas_call(
        kernel,
        out_shape=out_shape,
        grid=grid,
        in_specs=in_specs,
        out_specs=out_specs,
        compiler_params=pltpu.CompilerParams(
            # batch axis is independent per tile -> shards across 2 TCs on v7x
            dimension_semantics=("parallel",),
            vmem_limit_bytes=vmem_limit),
        cost_estimate=pl.CostEstimate(
            flops=flops, transcendentals=transcendentals,
            bytes_accessed=bytes_accessed),
    )(*inputs)

    # each grid step wrote one lane-dense (8,128) tile of identical partials
    return jnp.sum(partials.reshape(grid[0], 8, 128)[:, 0, 0])


def init_params(key, dim_feat, dim_latent, hash_bit, label):
    """Deterministic synthetic parameters (weights stored as (in, out))."""
    ks = jax.random.split(key, 12)

    def lin(kw, kb, fan_in, fan_out):
        s = 1.0 / jnp.sqrt(float(fan_in))
        w = jax.random.uniform(kw, (fan_in, fan_out), jnp.float32, -s, s)
        b = jax.random.uniform(kb, (fan_out,), jnp.float32, -s, s)
        return w, b

    p = {}
    p["w11"], p["b11"] = lin(ks[0], ks[1], dim_feat, dim_latent)     # fc1_1
    p["w12"], p["b12"] = lin(ks[2], ks[3], dim_latent, dim_feat)     # fc1_2
    p["w21"], p["b21"] = lin(ks[4], ks[5], dim_feat, dim_latent)     # fc2_1
    p["w22"], p["b22"] = lin(ks[6], ks[7], dim_latent, dim_feat)     # fc2_2
    p["wcla"], p["bcla"] = lin(ks[8], ks[9], dim_feat, label)        # fc_to_cla
    p["wlsh"], p["blsh"] = lin(ks[10], ks[11], dim_feat, hash_bit)   # fc_to_lsh
    return p


if __name__ == "__main__":
    # Small shapes; B=32 is split into two 16-row tiles so the "parallel"
    # batch grid has 2 steps (both v7x TensorCores get work).
    B, DIM_FEAT, DIM_LATENT, HASH_BIT, LABEL = 32, 32, 10, 16, 8

    key = jax.random.PRNGKey(0)
    k_x, k_t, k_l, k_p = jax.random.split(key, 4)

    x = jax.random.normal(k_x, (B, DIM_FEAT), jnp.float32)
    target_data = jax.random.normal(k_t, (B, DIM_FEAT), jnp.float32)
    lsh = jax.random.normal(k_l, (B, HASH_BIT), jnp.float32)

    # MultiLabelMarginLoss labels: class indices, -1 terminated, shape (B, LABEL)
    labels = jnp.full((B, LABEL), -1, jnp.int32)
    labels = labels.at[:, 0].set(jnp.arange(B, dtype=jnp.int32) % LABEL)
    labels = labels.at[:, 1].set((jnp.arange(B, dtype=jnp.int32) + 3) % LABEL)

    params = init_params(k_p, DIM_FEAT, DIM_LATENT, HASH_BIT, LABEL)

    loss = jax.jit(dan_forward_loss)(x, target_data, lsh, labels, params)
    jax.block_until_ready(loss)
    print("KERNEL_OK")
</pallas_src>

<mosaic_0001>
module attributes {stable_mosaic.version = 11 : i64} {
  func.func @kernel(%arg0: i32, %arg1: memref<16x128xf32, #tpu.memory_space<vmem>>, %arg2: memref<16x128xf32, #tpu.memory_space<vmem>>, %arg3: memref<16x128xf32, #tpu.memory_space<vmem>>, %arg4: memref<16x8xi32, #tpu.memory_space<vmem>>, %arg5: memref<128x128xbf16, #tpu.memory_space<vmem>>, %arg6: memref<1x128xf32, #tpu.memory_space<vmem>>, %arg7: memref<128x128xbf16, #tpu.memory_space<vmem>>, %arg8: memref<1x128xf32, #tpu.memory_space<vmem>>, %arg9: memref<128x128xbf16, #tpu.memory_space<vmem>>, %arg10: memref<1x128xf32, #tpu.memory_space<vmem>>, %arg11: memref<128x128xbf16, #tpu.memory_space<vmem>>, %arg12: memref<1x128xf32, #tpu.memory_space<vmem>>, %arg13: memref<128x256xbf16, #tpu.memory_space<vmem>>, %arg14: memref<1x256xf32, #tpu.memory_space<vmem>>, %arg15: memref<8x128xf32, #tpu.memory_space<vmem>>) attributes {dimension_semantics = [#tpu.dimension_semantics<parallel>], iteration_bounds = array<i64: 2>, scalar_prefetch = 0 : i64, scratch_operands = 0 : i64, tpu.core_type = #tpu.core_type<tc>, window_params = [{transform_indices = @transform_0, window_bounds = array<i64: 16, 128>}, {transform_indices = @transform_1, window_bounds = array<i64: 16, 128>}, {transform_indices = @transform_2, window_bounds = array<i64: 16, 128>}, {transform_indices = @transform_3, window_bounds = array<i64: 16, 8>}, {pipeline_mode = #tpu.pipeline_mode<synchronous>, transform_indices = @transform_4, window_bounds = array<i64: 128, 128>}, {pipeline_mode = #tpu.pipeline_mode<synchronous>, transform_indices = @transform_5, window_bounds = array<i64: 1, 128>}, {pipeline_mode = #tpu.pipeline_mode<synchronous>, transform_indices = @transform_6, window_bounds = array<i64: 128, 128>}, {pipeline_mode = #tpu.pipeline_mode<synchronous>, transform_indices = @transform_7, window_bounds = array<i64: 1, 128>}, {pipeline_mode = #tpu.pipeline_mode<synchronous>, transform_indices = @transform_8, window_bounds = array<i64: 128, 128>}, {pipeline_mode = #tpu.pipeline_mode<synchronous>, transform_indices = @transform_9, window_bounds = array<i64: 1, 128>}, {pipeline_mode = #tpu.pipeline_mode<synchronous>, transform_indices = @transform_10, window_bounds = array<i64: 128, 128>}, {pipeline_mode = #tpu.pipeline_mode<synchronous>, transform_indices = @transform_11, window_bounds = array<i64: 1, 128>}, {pipeline_mode = #tpu.pipeline_mode<synchronous>, transform_indices = @transform_12, window_bounds = array<i64: 128, 256>}, {pipeline_mode = #tpu.pipeline_mode<synchronous>, transform_indices = @transform_13, window_bounds = array<i64: 1, 256>}, {transform_indices = @transform_14, window_bounds = array<i64: 8, 128>}]} {
    %c0 = arith.constant 0 : index
    %c0_0 = arith.constant 0 : index
    %0 = vector.load %arg1[%c0, %c0_0] : memref<16x128xf32, #tpu.memory_space<vmem>>, vector<16x128xf32>
    %1 = arith.truncf %0 : vector<16x128xf32> to vector<16x128xbf16>
    %c0_1 = arith.constant 0 : index
    %c0_2 = arith.constant 0 : index
    %2 = vector.load %arg2[%c0_1, %c0_2] : memref<16x128xf32, #tpu.memory_space<vmem>>, vector<16x128xf32>
    %c0_3 = arith.constant 0 : index
    %c0_4 = arith.constant 0 : index
    %3 = vector.load %arg3[%c0_3, %c0_4] : memref<16x128xf32, #tpu.memory_space<vmem>>, vector<16x128xf32>
    %c0_5 = arith.constant 0 : index
    %c0_6 = arith.constant 0 : index
    %4 = vector.load %arg5[%c0_5, %c0_6] : memref<128x128xbf16, #tpu.memory_space<vmem>>, vector<128x128xbf16>
    %cst = arith.constant dense<0.000000e+00> : vector<16x128xf32>
    %5 = tpu.matmul %1, %4, %cst {dimension_numbers = #tpu.dot_dimension_numbers<[1], [0], [0], [1], [0, 0, 1, 1], [], []>} : vector<16x128xbf16>, vector<128x128xbf16>, vector<16x128xf32> -> vector<16x128xf32>
    %c0_7 = arith.constant 0 : index
    %c0_8 = arith.constant 0 : index
    %6 = vector.load %arg6[%c0_7, %c0_8] : memref<1x128xf32, #tpu.memory_space<vmem>>, vector<1x128xf32>
    %7 = vector.broadcast %6 : vector<1x128xf32> to vector<16x128xf32>
    %8 = arith.addf %5, %7 : vector<16x128xf32>
    %cst_9 = arith.constant 0.000000e+00 : f32
    %9 = vector.broadcast %cst_9 : f32 to vector<16x128xf32>
    %10 = arith.cmpf oge, %8, %9 : vector<16x128xf32>
    %cst_10 = arith.constant 0.00999999977 : f32
    %11 = vector.broadcast %cst_10 : f32 to vector<16x128xf32>
    %12 = arith.mulf %11, %8 : vector<16x128xf32>
    %13 = arith.select %10, %8, %12 : vector<16x128xi1>, vector<16x128xf32>
    %14 = arith.truncf %13 : vector<16x128xf32> to vector<16x128xbf16>
    %c0_11 = arith.constant 0 : index
    %c0_12 = arith.constant 0 : index
    %15 = vector.load %arg7[%c0_11, %c0_12] : memref<128x128xbf16, #tpu.memory_space<vmem>>, vector<128x128xbf16>
    %cst_13 = arith.constant dense<0.000000e+00> : vector<16x128xf32>
    %16 = tpu.matmul %14, %15, %cst_13 {dimension_numbers = #tpu.dot_dimension_numbers<[1], [0], [0], [1], [0, 0, 1, 1], [], []>} : vector<16x128xbf16>, vector<128x128xbf16>, vector<16x128xf32> -> vector<16x128xf32>
    %c0_14 = arith.constant 0 : index
    %c0_15 = arith.constant 0 : index
    %17 = vector.load %arg8[%c0_14, %c0_15] : memref<1x128xf32, #tpu.memory_space<vmem>>, vector<1x128xf32>
    %18 = vector.broadcast %17 : vector<1x128xf32> to vector<16x128xf32>
    %19 = arith.addf %16, %18 : vector<16x128xf32>
    %cst_16 = arith.constant 0.000000e+00 : f32
    %20 = vector.broadcast %cst_16 : f32 to vector<16x128xf32>
    %21 = arith.cmpf oge, %19, %20 : vector<16x128xf32>
    %cst_17 = arith.constant 0.00999999977 : f32
    %22 = vector.broadcast %cst_17 : f32 to vector<16x128xf32>
    %23 = arith.mulf %22, %19 : vector<16x128xf32>
    %24 = arith.select %21, %19, %23 : vector<16x128xi1>, vector<16x128xf32>
    %25 = arith.addf %0, %24 : vector<16x128xf32>
    %26 = arith.truncf %25 : vector<16x128xf32> to vector<16x128xbf16>
    %c0_18 = arith.constant 0 : index
    %c0_19 = arith.constant 0 : index
    %27 = vector.load %arg9[%c0_18, %c0_19] : memref<128x128xbf16, #tpu.memory_space<vmem>>, vector<128x128xbf16>
    %cst_20 = arith.constant dense<0.000000e+00> : vector<16x128xf32>
    %28 = tpu.matmul %26, %27, %cst_20 {dimension_numbers = #tpu.dot_dimension_numbers<[1], [0], [0], [1], [0, 0, 1, 1], [], []>} : vector<16x128xbf16>, vector<128x128xbf16>, vector<16x128xf32> -> vector<16x128xf32>
    %c0_21 = arith.constant 0 : index
    %c0_22 = arith.constant 0 : index
    %29 = vector.load %arg10[%c0_21, %c0_22] : memref<1x128xf32, #tpu.memory_space<vmem>>, vector<1x128xf32>
    %30 = vector.broadcast %29 : vector<1x128xf32> to vector<16x128xf32>
    %31 = arith.addf %28, %30 : vector<16x128xf32>
    %cst_23 = arith.constant 0.000000e+00 : f32
    %32 = vector.broadcast %cst_23 : f32 to vector<16x128xf32>
    %33 = arith.cmpf oge, %31, %32 : vector<16x128xf32>
    %cst_24 = arith.constant 0.00999999977 : f32
    %34 = vector.broadcast %cst_24 : f32 to vector<16x128xf32>
    %35 = arith.mulf %34, %31 : vector<16x128xf32>
    %36 = arith.select %33, %31, %35 : vector<16x128xi1>, vector<16x128xf32>
    %37 = arith.truncf %36 : vector<16x128xf32> to vector<16x128xbf16>
    %c0_25 = arith.constant 0 : index
    %c0_26 = arith.constant 0 : index
    %38 = vector.load %arg11[%c0_25, %c0_26] : memref<128x128xbf16, #tpu.memory_space<vmem>>, vector<128x128xbf16>
    %cst_27 = arith.constant dense<0.000000e+00> : vector<16x128xf32>
    %39 = tpu.matmul %37, %38, %cst_27 {dimension_numbers = #tpu.dot_dimension_numbers<[1], [0], [0], [1], [0, 0, 1, 1], [], []>} : vector<16x128xbf16>, vector<128x128xbf16>, vector<16x128xf32> -> vector<16x128xf32>
    %c0_28 = arith.constant 0 : index
    %c0_29 = arith.constant 0 : index
    %40 = vector.load %arg12[%c0_28, %c0_29] : memref<1x128xf32, #tpu.memory_space<vmem>>, vector<1x128xf32>
    %41 = vector.broadcast %40 : vector<1x128xf32> to vector<16x128xf32>
    %42 = arith.addf %39, %41 : vector<16x128xf32>
    %cst_30 = arith.constant 0.000000e+00 : f32
    %43 = vector.broadcast %cst_30 : f32 to vector<16x128xf32>
    %44 = arith.cmpf oge, %42, %43 : vector<16x128xf32>
    %cst_31 = arith.constant 0.00999999977 : f32
    %45 = vector.broadcast %cst_31 : f32 to vector<16x128xf32>
    %46 = arith.mulf %45, %42 : vector<16x128xf32>
    %47 = arith.select %44, %42, %46 : vector<16x128xi1>, vector<16x128xf32>
    %48 = arith.addf %47, %25 : vector<16x128xf32>
    %49 = arith.addf %48, %0 : vector<16x128xf32>
    %50 = arith.truncf %49 : vector<16x128xf32> to vector<16x128xbf16>
    %c0_32 = arith.constant 0 : index
    %c0_33 = arith.constant 0 : index
    %51 = vector.load %arg13[%c0_32, %c0_33] : memref<128x256xbf16, #tpu.memory_space<vmem>>, vector<128x256xbf16>
    %cst_34 = arith.constant dense<0.000000e+00> : vector<16x256xf32>
    %52 = tpu.matmul %50, %51, %cst_34 {dimension_numbers = #tpu.dot_dimension_numbers<[1], [0], [0], [1], [0, 0, 1, 1], [], []>} : vector<16x128xbf16>, vector<128x256xbf16>, vector<16x256xf32> -> vector<16x256xf32>
    %c0_35 = arith.constant 0 : index
    %c0_36 = arith.constant 0 : index
    %53 = vector.load %arg14[%c0_35, %c0_36] : memref<1x256xf32, #tpu.memory_space<vmem>>, vector<1x256xf32>
    %54 = vector.broadcast %53 : vector<1x256xf32> to vector<16x256xf32>
    %55 = arith.addf %52, %54 : vector<16x256xf32>
    %56 = vector.extract_strided_slice %55 {offsets = [0, 0], sizes = [16, 128], strides = [1, 1]} : vector<16x256xf32> to vector<16x128xf32>
    %57 = vector.extract_strided_slice %55 {offsets = [0, 128], sizes = [16, 128], strides = [1, 1]} : vector<16x256xf32> to vector<16x128xf32>
    %58 = math.tanh %57 : vector<16x128xf32>
    %c16_i32 = arith.constant 16 : i32
    %59 = arith.muli %arg0, %c16_i32 : i32
    %60 = tpu.iota {dimensions = array<i32: 0>} : vector<16x1xi32>
    %61 = vector.broadcast %59 : i32 to vector<16x1xi32>
    %62 = arith.addi %61, %60 : vector<16x1xi32>
    %c32_i32 = arith.constant 32 : i32
    %63 = vector.broadcast %c32_i32 : i32 to vector<16x1xi32>
    %64 = arith.cmpi slt, %62, %63 : vector<16x1xi32>
    %65 = tpu.iota {dimensions = array<i32: 1>} : vector<1x128xi32>
    %c16_i32_37 = arith.constant 16 : i32
    %66 = vector.broadcast %c16_i32_37 : i32 to vector<1x128xi32>
    %67 = arith.cmpi slt, %65, %66 : vector<1x128xi32>
    %68 = tpu.iota {dimensions = array<i32: 1>} : vector<1x128xi32>
    %c8_i32 = arith.constant 8 : i32
    %69 = vector.broadcast %c8_i32 : i32 to vector<1x128xi32>
    %70 = arith.cmpi slt, %68, %69 : vector<1x128xi32>
    %71 = arith.extui %64 : vector<16x1xi1> to vector<16x1xi32>
    %72 = arith.sitofp %71 : vector<16x1xi32> to vector<16x1xf32>
    %73 = arith.subf %49, %2 : vector<16x128xf32>
    %74 = arith.mulf %73, %73 : vector<16x128xf32>
    %cst_38 = arith.constant 0.000000e+00 : f32
    %75 = vector.shape_cast %64 : vector<16x1xi1> to vector<16x1xi1>
    %76 = vector.broadcast %75 : vector<16x1xi1> to vector<16x128xi1>
    %77 = vector.broadcast %cst_38 : f32 to vector<16x128xf32>
    %78 = arith.select %76, %74, %77 : vector<16x128xi1>, vector<16x128xf32>
    %79 = vector.shape_cast %78 : vector<16x128xf32> to vector<1x16x128xf32>
    %cst_39 = arith.constant dense<0.000000e+00> : vector<1xf32>
    %80 = vector.multi_reduction <add>, %79, %cst_39 [1, 2] : vector<1x16x128xf32> to vector<1xf32>
    %81 = vector.shape_cast %80 : vector<1xf32> to vector<1x1x1xf32>
    %82 = vector.extract %81[0, 0, 0] : f32 from vector<1x1x1xf32>
    %83 = vector.broadcast %82 : f32 to vector<1x1xf32>
    %84 = arith.subf %58, %3 : vector<16x128xf32>
    %85 = arith.mulf %84, %84 : vector<16x128xf32>
    %cst_40 = arith.constant 0.000000e+00 : f32
    %86 = vector.shape_cast %64 : vector<16x1xi1> to vector<16x1xi1>
    %87 = vector.broadcast %86 : vector<16x1xi1> to vector<16x128xi1>
    %88 = vector.broadcast %cst_40 : f32 to vector<16x128xf32>
    %89 = arith.select %87, %85, %88 : vector<16x128xi1>, vector<16x128xf32>
    %90 = vector.shape_cast %89 : vector<16x128xf32> to vector<1x16x128xf32>
    %cst_41 = arith.constant dense<0.000000e+00> : vector<1xf32>
    %91 = vector.multi_reduction <add>, %90, %cst_41 [1, 2] : vector<1x16x128xf32> to vector<1xf32>
    %92 = vector.shape_cast %91 : vector<1xf32> to vector<1x1x1xf32>
    %93 = vector.extract %92[0, 0, 0] : f32 from vector<1x1x1xf32>
    %94 = vector.broadcast %93 : f32 to vector<1x1xf32>
    %95 = tpu.iota {dimensions = array<i32: 1>} : vector<1x128xi32>
    %cst_42 = arith.constant 0.000000e+00 : f32
    %96 = vector.broadcast %cst_42 : f32 to vector<16x128xf32>
    %c0_43 = arith.constant 0 : index
    %c0_44 = arith.constant 0 : index
    %97 = vector.load %arg4[%c0_43, %c0_44] : memref<16x8xi32, #tpu.memory_space<vmem>>, vector<16x1xi32>
    %c0_i32 = arith.constant 0 : i32
    %98 = vector.broadcast %c0_i32 : i32 to vector<16x1xi32>
    %99 = arith.cmpi sge, %97, %98 : vector<16x1xi32>
    %100 = arith.extui %99 : vector<16x1xi1> to vector<16x1xi32>
    %101 = arith.sitofp %100 : vector<16x1xi32> to vector<16x1xf32>
    %102 = arith.mulf %72, %101 : vector<16x1xf32>
    %103 = vector.broadcast %95 : vector<1x128xi32> to vector<16x128xi32>
    %104 = vector.broadcast %97 : vector<16x1xi32> to vector<16x128xi32>
    %105 = arith.cmpi eq, %103, %104 : vector<16x128xi32>
    %cst_45 = arith.constant 1.000000e+00 : f32
    %cst_46 = arith.constant 0.000000e+00 : f32
    %106 = vector.broadcast %cst_45 : f32 to vector<16x128xf32>
    %107 = vector.broadcast %cst_46 : f32 to vector<16x128xf32>
    %108 = arith.select %105, %106, %107 : vector<16x128xi1>, vector<16x128xf32>
    %109 = vector.broadcast %102 : vector<16x1xf32> to vector<16x128xf32>
    %110 = arith.mulf %108, %109 : vector<16x128xf32>
    %111 = arith.maximumf %96, %110 : vector<16x128xf32>
    %112 = arith.mulf %110, %56 : vector<16x128xf32>
    %cst_47 = arith.constant dense<0.000000e+00> : vector<16xf32>
    %113 = vector.multi_reduction <add>, %112, %cst_47 [1] : vector<16x128xf32> to vector<16xf32>
    %114 = vector.shape_cast %113 : vector<16xf32> to vector<16x1xf32>
    %c0_48 = arith.constant 0 : index
    %c1 = arith.constant 1 : index
    %115 = vector.load %arg4[%c0_48, %c1] : memref<16x8xi32, #tpu.memory_space<vmem>>, vector<16x1xi32>
    %c0_i32_49 = arith.constant 0 : i32
    %116 = vector.broadcast %c0_i32_49 : i32 to vector<16x1xi32>
    %117 = arith.cmpi sge, %115, %116 : vector<16x1xi32>
    %118 = arith.extui %117 : vector<16x1xi1> to vector<16x1xi32>
    %119 = arith.sitofp %118 : vector<16x1xi32> to vector<16x1xf32>
    %120 = arith.mulf %102, %119 : vector<16x1xf32>
    %121 = vector.broadcast %95 : vector<1x128xi32> to vector<16x128xi32>
    %122 = vector.broadcast %115 : vector<16x1xi32> to vector<16x128xi32>
    %123 = arith.cmpi eq, %121, %122 : vector<16x128xi32>
    %cst_50 = arith.constant 1.000000e+00 : f32
    %cst_51 = arith.constant 0.000000e+00 : f32
    %124 = vector.broadcast %cst_50 : f32 to vector<16x128xf32>
    %125 = vector.broadcast %cst_51 : f32 to vector<16x128xf32>
    %126 = arith.select %123, %124, %125 : vector<16x128xi1>, vector<16x128xf32>
    %127 = vector.broadcast %120 : vector<16x1xf32> to vector<16x128xf32>
    %128 = arith.mulf %126, %127 : vector<16x128xf32>
    %129 = arith.maximumf %111, %128 : vector<16x128xf32>
    %130 = arith.mulf %128, %56 : vector<16x128xf32>
    %cst_52 = arith.constant dense<0.000000e+00> : vector<16xf32>
    %131 = vector.multi_reduction <add>, %130, %cst_52 [1] : vector<16x128xf32> to vector<16xf32>
    %132 = vector.shape_cast %131 : vector<16xf32> to vector<16x1xf32>
    %c0_53 = arith.constant 0 : index
    %c2 = arith.constant 2 : index
    %133 = vector.load %arg4[%c0_53, %c2] : memref<16x8xi32, #tpu.memory_space<vmem>>, vector<16x1xi32>
    %c0_i32_54 = arith.constant 0 : i32
    %134 = vector.broadcast %c0_i32_54 : i32 to vector<16x1xi32>
    %135 = arith.cmpi sge, %133, %134 : vector<16x1xi32>
    %136 = arith.extui %135 : vector<16x1xi1> to vector<16x1xi32>
    %137 = arith.sitofp %136 : vector<16x1xi32> to vector<16x1xf32>
    %138 = arith.mulf %120, %137 : vector<16x1xf32>
    %139 = vector.broadcast %95 : vector<1x128xi32> to vector<16x128xi32>
    %140 = vector.broadcast %133 : vector<16x1xi32> to vector<16x128xi32>
    %141 = arith.cmpi eq, %139, %140 : vector<16x128xi32>
    %cst_55 = arith.constant 1.000000e+00 : f32
    %cst_56 = arith.constant 0.000000e+00 : f32
    %142 = vector.broadcast %cst_55 : f32 to vector<16x128xf32>
    %143 = vector.broadcast %cst_56 : f32 to vector<16x128xf32>
    %144 = arith.select %141, %142, %143 : vector<16x128xi1>, vector<16x128xf32>
    %145 = vector.broadcast %138 : vector<16x1xf32> to vector<16x128xf32>
    %146 = arith.mulf %144, %145 : vector<16x128xf32>
    %147 = arith.maximumf %129, %146 : vector<16x128xf32>
    %148 = arith.mulf %146, %56 : vector<16x128xf32>
    %cst_57 = arith.constant dense<0.000000e+00> : vector<16xf32>
    %149 = vector.multi_reduction <add>, %148, %cst_57 [1] : vector<16x128xf32> to vector<16xf32>
    %150 = vector.shape_cast %149 : vector<16xf32> to vector<16x1xf32>
    %c0_58 = arith.constant 0 : index
    %c3 = arith.constant 3 : index
    %151 = vector.load %arg4[%c0_58, %c3] : memref<16x8xi32, #tpu.memory_space<vmem>>, vector<16x1xi32>
    %c0_i32_59 = arith.constant 0 : i32
    %152 = vector.broadcast %c0_i32_59 : i32 to vector<16x1xi32>
    %153 = arith.cmpi sge, %151, %152 : vector<16x1xi32>
    %154 = arith.extui %153 : vector<16x1xi1> to vector<16x1xi32>
    %155 = arith.sitofp %154 : vector<16x1xi32> to vector<16x1xf32>
    %156 = arith.mulf %138, %155 : vector<16x1xf32>
    %157 = vector.broadcast %95 : vector<1x128xi32> to vector<16x128xi32>
    %158 = vector.broadcast %151 : vector<16x1xi32> to vector<16x128xi32>
    %159 = arith.cmpi eq, %157, %158 : vector<16x128xi32>
    %cst_60 = arith.constant 1.000000e+00 : f32
    %cst_61 = arith.constant 0.000000e+00 : f32
    %160 = vector.broadcast %cst_60 : f32 to vector<16x128xf32>
    %161 = vector.broadcast %cst_61 : f32 to vector<16x128xf32>
    %162 = arith.select %159, %160, %161 : vector<16x128xi1>, vector<16x128xf32>
    %163 = vector.broadcast %156 : vector<16x1xf32> to vector<16x128xf32>
    %164 = arith.mulf %162, %163 : vector<16x128xf32>
    %165 = arith.maximumf %147, %164 : vector<16x128xf32>
    %166 = arith.mulf %164, %56 : vector<16x128xf32>
    %cst_62 = arith.constant dense<0.000000e+00> : vector<16xf32>
    %167 = vector.multi_reduction <add>, %166, %cst_62 [1] : vector<16x128xf32> to vector<16xf32>
    %168 = vector.shape_cast %167 : vector<16xf32> to vector<16x1xf32>
    %c0_63 = arith.constant 0 : index
    %c4 = arith.constant 4 : index
    %169 = vector.load %arg4[%c0_63, %c4] : memref<16x8xi32, #tpu.memory_space<vmem>>, vector<16x1xi32>
    %c0_i32_64 = arith.constant 0 : i32
    %170 = vector.broadcast %c0_i32_64 : i32 to vector<16x1xi32>
    %171 = arith.cmpi sge, %169, %170 : vector<16x1xi32>
    %172 = arith.extui %171 : vector<16x1xi1> to vector<16x1xi32>
    %173 = arith.sitofp %172 : vector<16x1xi32> to vector<16x1xf32>
    %174 = arith.mulf %156, %173 : vector<16x1xf32>
    %175 = vector.broadcast %95 : vector<1x128xi32> to vector<16x128xi32>
    %176 = vector.broadcast %169 : vector<16x1xi32> to vector<16x128xi32>
    %177 = arith.cmpi eq, %175, %176 : vector<16x128xi32>
    %cst_65 = arith.constant 1.000000e+00 : f32
    %cst_66 = arith.constant 0.000000e+00 : f32
    %178 = vector.broadcast %cst_65 : f32 to vector<16x128xf32>
    %179 = vector.broadcast %cst_66 : f32 to vector<16x128xf32>
    %180 = arith.select %177, %178, %179 : vector<16x128xi1>, vector<16x128xf32>
    %181 = vector.broadcast %174 : vector<16x1xf32> to vector<16x128xf32>
    %182 = arith.mulf %180, %181 : vector<16x128xf32>
    %183 = arith.maximumf %165, %182 : vector<16x128xf32>
    %184 = arith.mulf %182, %56 : vector<16x128xf32>
    %cst_67 = arith.constant dense<0.000000e+00> : vector<16xf32>
    %185 = vector.multi_reduction <add>, %184, %cst_67 [1] : vector<16x128xf32> to vector<16xf32>
    %186 = vector.shape_cast %185 : vector<16xf32> to vector<16x1xf32>
    %c0_68 = arith.constant 0 : index
    %c5 = arith.constant 5 : index
    %187 = vector.load %arg4[%c0_68, %c5] : memref<16x8xi32, #tpu.memory_space<vmem>>, vector<16x1xi32>
    %c0_i32_69 = arith.constant 0 : i32
    %188 = vector.broadcast %c0_i32_69 : i32 to vector<16x1xi32>
    %189 = arith.cmpi sge, %187, %188 : vector<16x1xi32>
    %190 = arith.extui %189 : vector<16x1xi1> to vector<16x1xi32>
    %191 = arith.sitofp %190 : vector<16x1xi32> to vector<16x1xf32>
    %192 = arith.mulf %174, %191 : vector<16x1xf32>
    %193 = vector.broadcast %95 : vector<1x128xi32> to vector<16x128xi32>
    %194 = vector.broadcast %187 : vector<16x1xi32> to vector<16x128xi32>
    %195 = arith.cmpi eq, %193, %194 : vector<16x128xi32>
    %cst_70 = arith.constant 1.000000e+00 : f32
    %cst_71 = arith.constant 0.000000e+00 : f32
    %196 = vector.broadcast %cst_70 : f32 to vector<16x128xf32>
    %197 = vector.broadcast %cst_71 : f32 to vector<16x128xf32>
    %198 = arith.select %195, %196, %197 : vector<16x128xi1>, vector<16x128xf32>
    %199 = vector.broadcast %192 : vector<16x1xf32> to vector<16x128xf32>
    %200 = arith.mulf %198, %199 : vector<16x128xf32>
    %201 = arith.maximumf %183, %200 : vector<16x128xf32>
    %202 = arith.mulf %200, %56 : vector<16x128xf32>
    %cst_72 = arith.constant dense<0.000000e+00> : vector<16xf32>
    %203 = vector.multi_reduction <add>, %202, %cst_72 [1] : vector<16x128xf32> to vector<16xf32>
    %204 = vector.shape_cast %203 : vector<16xf32> to vector<16x1xf32>
    %c0_73 = arith.constant 0 : index
    %c6 = arith.constant 6 : index
    %205 = vector.load %arg4[%c0_73, %c6] : memref<16x8xi32, #tpu.memory_space<vmem>>, vector<16x1xi32>
    %c0_i32_74 = arith.constant 0 : i32
    %206 = vector.broadcast %c0_i32_74 : i32 to vector<16x1xi32>
    %207 = arith.cmpi sge, %205, %206 : vector<16x1xi32>
    %208 = arith.extui %207 : vector<16x1xi1> to vector<16x1xi32>
    %209 = arith.sitofp %208 : vector<16x1xi32> to vector<16x1xf32>
    %210 = arith.mulf %192, %209 : vector<16x1xf32>
    %211 = vector.broadcast %95 : vector<1x128xi32> to vector<16x128xi32>
    %212 = vector.broadcast %205 : vector<16x1xi32> to vector<16x128xi32>
    %213 = arith.cmpi eq, %211, %212 : vector<16x128xi32>
    %cst_75 = arith.constant 1.000000e+00 : f32
    %cst_76 = arith.constant 0.000000e+00 : f32
    %214 = vector.broadcast %cst_75 : f32 to vector<16x128xf32>
    %215 = vector.broadcast %cst_76 : f32 to vector<16x128xf32>
    %216 = arith.select %213, %214, %215 : vector<16x128xi1>, vector<16x128xf32>
    %217 = vector.broadcast %210 : vector<16x1xf32> to vector<16x128xf32>
    %218 = arith.mulf %216, %217 : vector<16x128xf32>
    %219 = arith.maximumf %201, %218 : vector<16x128xf32>
    %220 = arith.mulf %218, %56 : vector<16x128xf32>
    %cst_77 = arith.constant dense<0.000000e+00> : vector<16xf32>
    %221 = vector.multi_reduction <add>, %220, %cst_77 [1] : vector<16x128xf32> to vector<16xf32>
    %222 = vector.shape_cast %221 : vector<16xf32> to vector<16x1xf32>
    %c0_78 = arith.constant 0 : index
    %c7 = arith.constant 7 : index
    %223 = vector.load %arg4[%c0_78, %c7] : memref<16x8xi32, #tpu.memory_space<vmem>>, vector<16x1xi32>
    %c0_i32_79 = arith.constant 0 : i32
    %224 = vector.broadcast %c0_i32_79 : i32 to vector<16x1xi32>
    %225 = arith.cmpi sge, %223, %224 : vector<16x1xi32>
    %226 = arith.extui %225 : vector<16x1xi1> to vector<16x1xi32>
    %227 = arith.sitofp %226 : vector<16x1xi32> to vector<16x1xf32>
    %228 = arith.mulf %210, %227 : vector<16x1xf32>
    %229 = vector.broadcast %95 : vector<1x128xi32> to vector<16x128xi32>
    %230 = vector.broadcast %223 : vector<16x1xi32> to vector<16x128xi32>
    %231 = arith.cmpi eq, %229, %230 : vector<16x128xi32>
    %cst_80 = arith.constant 1.000000e+00 : f32
    %cst_81 = arith.constant 0.000000e+00 : f32
    %232 = vector.broadcast %cst_80 : f32 to vector<16x128xf32>
    %233 = vector.broadcast %cst_81 : f32 to vector<16x128xf32>
    %234 = arith.select %231, %232, %233 : vector<16x128xi1>, vector<16x128xf32>
    %235 = vector.broadcast %228 : vector<16x1xf32> to vector<16x128xf32>
    %236 = arith.mulf %234, %235 : vector<16x128xf32>
    %237 = arith.maximumf %219, %236 : vector<16x128xf32>
    %238 = arith.mulf %236, %56 : vector<16x128xf32>
    %cst_82 = arith.constant dense<0.000000e+00> : vector<16xf32>
    %239 = vector.multi_reduction <add>, %238, %cst_82 [1] : vector<16x128xf32> to vector<16xf32>
    %240 = vector.shape_cast %239 : vector<16xf32> to vector<16x1xf32>
    %cst_83 = arith.constant 1.000000e+00 : f32
    %241 = vector.broadcast %cst_83 : f32 to vector<16x128xf32>
    %242 = arith.subf %241, %237 : vector<16x128xf32>
    %cst_84 = arith.constant 0.000000e+00 : f32
    %243 = vector.shape_cast %70 : vector<1x128xi1> to vector<1x128xi1>
    %244 = vector.broadcast %243 : vector<1x128xi1> to vector<16x128xi1>
    %245 = vector.broadcast %cst_84 : f32 to vector<16x128xf32>
    %246 = arith.select %244, %242, %245 : vector<16x128xi1>, vector<16x128xf32>
    %cst_85 = arith.constant 0.000000e+00 : f32
    %247 = vector.broadcast %cst_85 : f32 to vector<1x1xf32>
    %cst_86 = arith.constant 1.000000e+00 : f32
    %248 = vector.broadcast %cst_86 : f32 to vector<16x1xf32>
    %249 = arith.subf %248, %114 : vector<16x1xf32>
    %250 = vector.broadcast %249 : vector<16x1xf32> to vector<16x128xf32>
    %251 = arith.addf %250, %56 : vector<16x128xf32>
    %cst_87 = arith.constant 0.000000e+00 : f32
    %252 = vector.broadcast %cst_87 : f32 to vector<16x128xf32>
    %253 = arith.maximumf %251, %252 : vector<16x128xf32>
    %254 = arith.mulf %253, %246 : vector<16x128xf32>
    %255 = vector.broadcast %102 : vector<16x1xf32> to vector<16x128xf32>
    %256 = arith.mulf %254, %255 : vector<16x128xf32>
    %257 = vector.shape_cast %256 : vector<16x128xf32> to vector<1x16x128xf32>
    %cst_88 = arith.constant dense<0.000000e+00> : vector<1xf32>
    %258 = vector.multi_reduction <add>, %257, %cst_88 [1, 2] : vector<1x16x128xf32> to vector<1xf32>
    %259 = vector.shape_cast %258 : vector<1xf32> to vector<1x1x1xf32>
    %260 = vector.extract %259[0, 0, 0] : f32 from vector<1x1x1xf32>
    %261 = vector.broadcast %260 : f32 to vector<1x1xf32>
    %262 = arith.addf %247, %261 : vector<1x1xf32>
    %cst_89 = arith.constant 1.000000e+00 : f32
    %263 = vector.broadcast %cst_89 : f32 to vector<16x1xf32>
    %264 = arith.subf %263, %132 : vector<16x1xf32>
    %265 = vector.broadcast %264 : vector<16x1xf32> to vector<16x128xf32>
    %266 = arith.addf %265, %56 : vector<16x128xf32>
    %cst_90 = arith.constant 0.000000e+00 : f32
    %267 = vector.broadcast %cst_90 : f32 to vector<16x128xf32>
    %268 = arith.maximumf %266, %267 : vector<16x128xf32>
    %269 = arith.mulf %268, %246 : vector<16x128xf32>
    %270 = vector.broadcast %120 : vector<16x1xf32> to vector<16x128xf32>
    %271 = arith.mulf %269, %270 : vector<16x128xf32>
    %272 = vector.shape_cast %271 : vector<16x128xf32> to vector<1x16x128xf32>
    %cst_91 = arith.constant dense<0.000000e+00> : vector<1xf32>
    %273 = vector.multi_reduction <add>, %272, %cst_91 [1, 2] : vector<1x16x128xf32> to vector<1xf32>
    %274 = vector.shape_cast %273 : vector<1xf32> to vector<1x1x1xf32>
    %275 = vector.extract %274[0, 0, 0] : f32 from vector<1x1x1xf32>
    %276 = vector.broadcast %275 : f32 to vector<1x1xf32>
    %277 = arith.addf %262, %276 : vector<1x1xf32>
    %cst_92 = arith.constant 1.000000e+00 : f32
    %278 = vector.broadcast %cst_92 : f32 to vector<16x1xf32>
    %279 = arith.subf %278, %150 : vector<16x1xf32>
    %280 = vector.broadcast %279 : vector<16x1xf32> to vector<16x128xf32>
    %281 = arith.addf %280, %56 : vector<16x128xf32>
    %cst_93 = arith.constant 0.000000e+00 : f32
    %282 = vector.broadcast %cst_93 : f32 to vector<16x128xf32>
    %283 = arith.maximumf %281, %282 : vector<16x128xf32>
    %284 = arith.mulf %283, %246 : vector<16x128xf32>
    %285 = vector.broadcast %138 : vector<16x1xf32> to vector<16x128xf32>
    %286 = arith.mulf %284, %285 : vector<16x128xf32>
    %287 = vector.shape_cast %286 : vector<16x128xf32> to vector<1x16x128xf32>
    %cst_94 = arith.constant dense<0.000000e+00> : vector<1xf32>
    %288 = vector.multi_reduction <add>, %287, %cst_94 [1, 2] : vector<1x16x128xf32> to vector<1xf32>
    %289 = vector.shape_cast %288 : vector<1xf32> to vector<1x1x1xf32>
    %290 = vector.extract %289[0, 0, 0] : f32 from vector<1x1x1xf32>
    %291 = vector.broadcast %290 : f32 to vector<1x1xf32>
    %292 = arith.addf %277, %291 : vector<1x1xf32>
    %cst_95 = arith.constant 1.000000e+00 : f32
    %293 = vector.broadcast %cst_95 : f32 to vector<16x1xf32>
    %294 = arith.subf %293, %168 : vector<16x1xf32>
    %295 = vector.broadcast %294 : vector<16x1xf32> to vector<16x128xf32>
    %296 = arith.addf %295, %56 : vector<16x128xf32>
    %cst_96 = arith.constant 0.000000e+00 : f32
    %297 = vector.broadcast %cst_96 : f32 to vector<16x128xf32>
    %298 = arith.maximumf %296, %297 : vector<16x128xf32>
    %299 = arith.mulf %298, %246 : vector<16x128xf32>
    %300 = vector.broadcast %156 : vector<16x1xf32> to vector<16x128xf32>
    %301 = arith.mulf %299, %300 : vector<16x128xf32>
    %302 = vector.shape_cast %301 : vector<16x128xf32> to vector<1x16x128xf32>
    %cst_97 = arith.constant dense<0.000000e+00> : vector<1xf32>
    %303 = vector.multi_reduction <add>, %302, %cst_97 [1, 2] : vector<1x16x128xf32> to vector<1xf32>
    %304 = vector.shape_cast %303 : vector<1xf32> to vector<1x1x1xf32>
    %305 = vector.extract %304[0, 0, 0] : f32 from vector<1x1x1xf32>
    %306 = vector.broadcast %305 : f32 to vector<1x1xf32>
    %307 = arith.addf %292, %306 : vector<1x1xf32>
    %cst_98 = arith.constant 1.000000e+00 : f32
    %308 = vector.broadcast %cst_98 : f32 to vector<16x1xf32>
    %309 = arith.subf %308, %186 : vector<16x1xf32>
    %310 = vector.broadcast %309 : vector<16x1xf32> to vector<16x128xf32>
    %311 = arith.addf %310, %56 : vector<16x128xf32>
    %cst_99 = arith.constant 0.000000e+00 : f32
    %312 = vector.broadcast %cst_99 : f32 to vector<16x128xf32>
    %313 = arith.maximumf %311, %312 : vector<16x128xf32>
    %314 = arith.mulf %313, %246 : vector<16x128xf32>
    %315 = vector.broadcast %174 : vector<16x1xf32> to vector<16x128xf32>
    %316 = arith.mulf %314, %315 : vector<16x128xf32>
    %317 = vector.shape_cast %316 : vector<16x128xf32> to vector<1x16x128xf32>
    %cst_100 = arith.constant dense<0.000000e+00> : vector<1xf32>
    %318 = vector.multi_reduction <add>, %317, %cst_100 [1, 2] : vector<1x16x128xf32> to vector<1xf32>
    %319 = vector.shape_cast %318 : vector<1xf32> to vector<1x1x1xf32>
    %320 = vector.extract %319[0, 0, 0] : f32 from vector<1x1x1xf32>
    %321 = vector.broadcast %320 : f32 to vector<1x1xf32>
    %322 = arith.addf %307, %321 : vector<1x1xf32>
    %cst_101 = arith.constant 1.000000e+00 : f32
    %323 = vector.broadcast %cst_101 : f32 to vector<16x1xf32>
    %324 = arith.subf %323, %204 : vector<16x1xf32>
    %325 = vector.broadcast %324 : vector<16x1xf32> to vector<16x128xf32>
    %326 = arith.addf %325, %56 : vector<16x128xf32>
    %cst_102 = arith.constant 0.000000e+00 : f32
    %327 = vector.broadcast %cst_102 : f32 to vector<16x128xf32>
    %328 = arith.maximumf %326, %327 : vector<16x128xf32>
    %329 = arith.mulf %328, %246 : vector<16x128xf32>
    %330 = vector.broadcast %192 : vector<16x1xf32> to vector<16x128xf32>
    %331 = arith.mulf %329, %330 : vector<16x128xf32>
    %332 = vector.shape_cast %331 : vector<16x128xf32> to vector<1x16x128xf32>
    %cst_103 = arith.constant dense<0.000000e+00> : vector<1xf32>
    %333 = vector.multi_reduction <add>, %332, %cst_103 [1, 2] : vector<1x16x128xf32> to vector<1xf32>
    %334 = vector.shape_cast %333 : vector<1xf32> to vector<1x1x1xf32>
    %335 = vector.extract %334[0, 0, 0] : f32 from vector<1x1x1xf32>
    %336 = vector.broadcast %335 : f32 to vector<1x1xf32>
    %337 = arith.addf %322, %336 : vector<1x1xf32>
    %cst_104 = arith.constant 1.000000e+00 : f32
    %338 = vector.broadcast %cst_104 : f32 to vector<16x1xf32>
    %339 = arith.subf %338, %222 : vector<16x1xf32>
    %340 = vector.broadcast %339 : vector<16x1xf32> to vector<16x128xf32>
    %341 = arith.addf %340, %56 : vector<16x128xf32>
    %cst_105 = arith.constant 0.000000e+00 : f32
    %342 = vector.broadcast %cst_105 : f32 to vector<16x128xf32>
    %343 = arith.maximumf %341, %342 : vector<16x128xf32>
    %344 = arith.mulf %343, %246 : vector<16x128xf32>
    %345 = vector.broadcast %210 : vector<16x1xf32> to vector<16x128xf32>
    %346 = arith.mulf %344, %345 : vector<16x128xf32>
    %347 = vector.shape_cast %346 : vector<16x128xf32> to vector<1x16x128xf32>
    %cst_106 = arith.constant dense<0.000000e+00> : vector<1xf32>
    %348 = vector.multi_reduction <add>, %347, %cst_106 [1, 2] : vector<1x16x128xf32> to vector<1xf32>
    %349 = vector.shape_cast %348 : vector<1xf32> to vector<1x1x1xf32>
    %350 = vector.extract %349[0, 0, 0] : f32 from vector<1x1x1xf32>
    %351 = vector.broadcast %350 : f32 to vector<1x1xf32>
    %352 = arith.addf %337, %351 : vector<1x1xf32>
    %cst_107 = arith.constant 1.000000e+00 : f32
    %353 = vector.broadcast %cst_107 : f32 to vector<16x1xf32>
    %354 = arith.subf %353, %240 : vector<16x1xf32>
    %355 = vector.broadcast %354 : vector<16x1xf32> to vector<16x128xf32>
    %356 = arith.addf %355, %56 : vector<16x128xf32>
    %cst_108 = arith.constant 0.000000e+00 : f32
    %357 = vector.broadcast %cst_108 : f32 to vector<16x128xf32>
    %358 = arith.maximumf %356, %357 : vector<16x128xf32>
    %359 = arith.mulf %358, %246 : vector<16x128xf32>
    %360 = vector.broadcast %228 : vector<16x1xf32> to vector<16x128xf32>
    %361 = arith.mulf %359, %360 : vector<16x128xf32>
    %362 = vector.shape_cast %361 : vector<16x128xf32> to vector<1x16x128xf32>
    %cst_109 = arith.constant dense<0.000000e+00> : vector<1xf32>
    %363 = vector.multi_reduction <add>, %362, %cst_109 [1, 2] : vector<1x16x128xf32> to vector<1xf32>
    %364 = vector.shape_cast %363 : vector<1xf32> to vector<1x1x1xf32>
    %365 = vector.extract %364[0, 0, 0] : f32 from vector<1x1x1xf32>
    %366 = vector.broadcast %365 : f32 to vector<1x1xf32>
    %367 = arith.addf %352, %366 : vector<1x1xf32>
    %cst_110 = arith.constant -1.000000e+30 : f32
    %368 = vector.shape_cast %67 : vector<1x128xi1> to vector<1x128xi1>
    %369 = vector.broadcast %368 : vector<1x128xi1> to vector<16x128xi1>
    %370 = vector.broadcast %cst_110 : f32 to vector<16x128xf32>
    %371 = arith.select %369, %58, %370 : vector<16x128xi1>, vector<16x128xf32>
    %cst_111 = arith.constant dense<0xFF800000> : vector<16xf32>
    %372 = vector.multi_reduction <maximumf>, %371, %cst_111 [1] : vector<16x128xf32> to vector<16xf32>
    %373 = vector.shape_cast %372 : vector<16xf32> to vector<16x1xf32>
    %374 = vector.broadcast %373 : vector<16x1xf32> to vector<16x128xf32>
    %375 = arith.subf %58, %374 : vector<16x128xf32>
    %376 = math.exp %375 : vector<16x128xf32>
    %cst_112 = arith.constant 0.000000e+00 : f32
    %377 = vector.shape_cast %67 : vector<1x128xi1> to vector<1x128xi1>
    %378 = vector.broadcast %377 : vector<1x128xi1> to vector<16x128xi1>
    %379 = vector.broadcast %cst_112 : f32 to vector<16x128xf32>
    %380 = arith.select %378, %376, %379 : vector<16x128xi1>, vector<16x128xf32>
    %cst_113 = arith.constant dense<0.000000e+00> : vector<16xf32>
    %381 = vector.multi_reduction <add>, %380, %cst_113 [1] : vector<16x128xf32> to vector<16xf32>
    %382 = vector.shape_cast %381 : vector<16xf32> to vector<16x1xf32>
    %383 = math.log %382 : vector<16x1xf32>
    %384 = arith.addf %383, %373 : vector<16x1xf32>
    %385 = vector.broadcast %384 : vector<16x1xf32> to vector<16x128xf32>
    %386 = arith.subf %58, %385 : vector<16x128xf32>
    %cst_114 = arith.constant -1.000000e+30 : f32
    %387 = vector.shape_cast %67 : vector<1x128xi1> to vector<1x128xi1>
    %388 = vector.broadcast %387 : vector<1x128xi1> to vector<16x128xi1>
    %389 = vector.broadcast %cst_114 : f32 to vector<16x128xf32>
    %390 = arith.select %388, %3, %389 : vector<16x128xi1>, vector<16x128xf32>
    %cst_115 = arith.constant dense<0xFF800000> : vector<16xf32>
    %391 = vector.multi_reduction <maximumf>, %390, %cst_115 [1] : vector<16x128xf32> to vector<16xf32>
    %392 = vector.shape_cast %391 : vector<16xf32> to vector<16x1xf32>
    %393 = vector.broadcast %392 : vector<16x1xf32> to vector<16x128xf32>
    %394 = arith.subf %3, %393 : vector<16x128xf32>
    %395 = math.exp %394 : vector<16x128xf32>
    %cst_116 = arith.constant 0.000000e+00 : f32
    %396 = vector.shape_cast %67 : vector<1x128xi1> to vector<1x128xi1>
    %397 = vector.broadcast %396 : vector<1x128xi1> to vector<16x128xi1>
    %398 = vector.broadcast %cst_116 : f32 to vector<16x128xf32>
    %399 = arith.select %397, %395, %398 : vector<16x128xi1>, vector<16x128xf32>
    %cst_117 = arith.constant dense<0.000000e+00> : vector<16xf32>
    %400 = vector.multi_reduction <add>, %399, %cst_117 [1] : vector<16x128xf32> to vector<16xf32>
    %401 = vector.shape_cast %400 : vector<16xf32> to vector<16x1xf32>
    %402 = vector.broadcast %401 : vector<16x1xf32> to vector<16x128xf32>
    %403 = arith.divf %399, %402 : vector<16x128xf32>
    %404 = vector.broadcast %392 : vector<16x1xf32> to vector<16x128xf32>
    %405 = arith.subf %3, %404 : vector<16x128xf32>
    %406 = math.log %401 : vector<16x1xf32>
    %407 = vector.broadcast %406 : vector<16x1xf32> to vector<16x128xf32>
    %408 = arith.subf %405, %407 : vector<16x128xf32>
    %409 = vector.broadcast %64 : vector<16x1xi1> to vector<16x128xi1>
    %410 = vector.broadcast %67 : vector<1x128xi1> to vector<16x128xi1>
    %411 = arith.andi %409, %410 : vector<16x128xi1>
    %412 = arith.subf %408, %386 : vector<16x128xf32>
    %413 = arith.mulf %403, %412 : vector<16x128xf32>
    %cst_118 = arith.constant 0.000000e+00 : f32
    %414 = vector.broadcast %cst_118 : f32 to vector<16x128xf32>
    %415 = arith.select %411, %413, %414 : vector<16x128xi1>, vector<16x128xf32>
    %416 = vector.shape_cast %415 : vector<16x128xf32> to vector<1x16x128xf32>
    %cst_119 = arith.constant dense<0.000000e+00> : vector<1xf32>
    %417 = vector.multi_reduction <add>, %416, %cst_119 [1, 2] : vector<1x16x128xf32> to vector<1xf32>
    %418 = vector.shape_cast %417 : vector<1xf32> to vector<1x1x1xf32>
    %419 = vector.extract %418[0, 0, 0] : f32 from vector<1x1x1xf32>
    %420 = vector.broadcast %419 : f32 to vector<1x1xf32>
    %cst_120 = arith.constant 1.024000e+03 : f32
    %421 = vector.broadcast %cst_120 : f32 to vector<1x1xf32>
    %422 = arith.divf %83, %421 : vector<1x1xf32>
    %cst_121 = arith.constant 2.560000e+02 : f32
    %423 = vector.broadcast %cst_121 : f32 to vector<1x1xf32>
    %424 = arith.divf %367, %423 : vector<1x1xf32>
    %425 = arith.addf %422, %424 : vector<1x1xf32>
    %426 = arith.subf %94, %420 : vector<1x1xf32>
    %cst_122 = arith.constant 5.120000e+02 : f32
    %427 = vector.broadcast %cst_122 : f32 to vector<1x1xf32>
    %428 = arith.divf %426, %427 : vector<1x1xf32>
    %429 = arith.addf %425, %428 : vector<1x1xf32>
    %430 = vector.shape_cast %429 : vector<1x1xf32> to vector<1x1xf32>
    %431 = vector.broadcast %430 : vector<1x1xf32> to vector<8x128xf32>
    %c0_123 = arith.constant 0 : index
    %c0_124 = arith.constant 0 : index
    %432 = vector.load %arg15[%c0_123, %c0_124] : memref<8x128xf32, #tpu.memory_space<vmem>>, vector<8x128xf32>
    tpu.vector_store %arg15[%c0_123, %c0_124], %431 {strides = array<i32>} : memref<8x128xf32, #tpu.memory_space<vmem>>, vector<8x128xf32>,
    return
  }
  func.func @transform_0(%arg0: i32) -> (i32, i32) {
    %c0_i32 = arith.constant 0 : i32
    %c0_i32_0 = arith.constant 0 : i32
    return %arg0, %c0_i32 : i32, i32
  }
  func.func @transform_1(%arg0: i32) -> (i32, i32) {
    %c0_i32 = arith.constant 0 : i32
    %c0_i32_0 = arith.constant 0 : i32
    return %arg0, %c0_i32 : i32, i32
  }
  func.func @transform_2(%arg0: i32) -> (i32, i32) {
    %c0_i32 = arith.constant 0 : i32
    %c0_i32_0 = arith.constant 0 : i32
    return %arg0, %c0_i32 : i32, i32
  }
  func.func @transform_3(%arg0: i32) -> (i32, i32) {
    %c0_i32 = arith.constant 0 : i32
    %c0_i32_0 = arith.constant 0 : i32
    return %arg0, %c0_i32 : i32, i32
  }
  func.func @transform_4(%arg0: i32) -> (i32, i32) {
    %c0_i32 = arith.constant 0 : i32
    %c0_i32_0 = arith.constant 0 : i32
    %c0_i32_1 = arith.constant 0 : i32
    return %c0_i32, %c0_i32_0 : i32, i32
  }
  func.func @transform_5(%arg0: i32) -> (i32, i32) {
    %c0_i32 = arith.constant 0 : i32
    %c0_i32_0 = arith.constant 0 : i32
    %c0_i32_1 = arith.constant 0 : i32
    return %c0_i32, %c0_i32_0 : i32, i32
  }
  func.func @transform_6(%arg0: i32) -> (i32, i32) {
    %c0_i32 = arith.constant 0 : i32
    %c0_i32_0 = arith.constant 0 : i32
    %c0_i32_1 = arith.constant 0 : i32
    return %c0_i32, %c0_i32_0 : i32, i32
  }
  func.func @transform_7(%arg0: i32) -> (i32, i32) {
    %c0_i32 = arith.constant 0 : i32
    %c0_i32_0 = arith.constant 0 : i32
    %c0_i32_1 = arith.constant 0 : i32
    return %c0_i32, %c0_i32_0 : i32, i32
  }
  func.func @transform_8(%arg0: i32) -> (i32, i32) {
    %c0_i32 = arith.constant 0 : i32
    %c0_i32_0 = arith.constant 0 : i32
    %c0_i32_1 = arith.constant 0 : i32
    return %c0_i32, %c0_i32_0 : i32, i32
  }
  func.func @transform_9(%arg0: i32) -> (i32, i32) {
    %c0_i32 = arith.constant 0 : i32
    %c0_i32_0 = arith.constant 0 : i32
    %c0_i32_1 = arith.constant 0 : i32
    return %c0_i32, %c0_i32_0 : i32, i32
  }
  func.func @transform_10(%arg0: i32) -> (i32, i32) {
    %c0_i32 = arith.constant 0 : i32
    %c0_i32_0 = arith.constant 0 : i32
    %c0_i32_1 = arith.constant 0 : i32
    return %c0_i32, %c0_i32_0 : i32, i32
  }
  func.func @transform_11(%arg0: i32) -> (i32, i32) {
    %c0_i32 = arith.constant 0 : i32
    %c0_i32_0 = arith.constant 0 : i32
    %c0_i32_1 = arith.constant 0 : i32
    return %c0_i32, %c0_i32_0 : i32, i32
  }
  func.func @transform_12(%arg0: i32) -> (i32, i32) {
    %c0_i32 = arith.constant 0 : i32
    %c0_i32_0 = arith.constant 0 : i32
    %c0_i32_1 = arith.constant 0 : i32
    return %c0_i32, %c0_i32_0 : i32, i32
  }
  func.func @transform_13(%arg0: i32) -> (i32, i32) {
    %c0_i32 = arith.constant 0 : i32
    %c0_i32_0 = arith.constant 0 : i32
    %c0_i32_1 = arith.constant 0 : i32
    return %c0_i32, %c0_i32_0 : i32, i32
  }
  func.func @transform_14(%arg0: i32) -> (i32, i32) {
    %c0_i32 = arith.constant 0 : i32
    %c0_i32_0 = arith.constant 0 : i32
    return %arg0, %c0_i32 : i32, i32
  }
}

</mosaic_0001>

<llo_original>
// kernel: dan_forward_loss.1
$region0: #{dan_forward_loss.1}
  #allocation0 [shape = 'u32[]', space=smem, size = 0x4, offset = 0x4, fixed_abs, tag = 'smem constant byte address 0x4 - core index']
  #allocation1 [shape = 'u32[72,128]{1,0:T(1,128)}', space=vmem, size = 0x9000, scoped, tag = 'internal scratch']
  %s0 = inlined_call_operand.vmem [shape: f32[32,128], index: 0, kind: input, shape index: {}]
  %s1 = inlined_call_operand.vmem [shape: f32[32,128], index: 1, kind: input, shape index: {}]
  %s2 = inlined_call_operand.vmem [shape: f32[32,128], index: 2, kind: input, shape index: {}]
  %s3 = inlined_call_operand.vmem [shape: s32[32,8], index: 3, kind: input, shape index: {}]
  %s4 = inlined_call_operand.vmem [shape: bf16[128,128], index: 4, kind: input, shape index: {}]
  %s5 = inlined_call_operand.vmem [shape: f32[1,128], index: 5, kind: input, shape index: {}]
  %s6 = inlined_call_operand.vmem [shape: bf16[128,128], index: 6, kind: input, shape index: {}]
  %s7 = inlined_call_operand.vmem [shape: f32[1,128], index: 7, kind: input, shape index: {}]
  %s8 = inlined_call_operand.vmem [shape: bf16[128,128], index: 8, kind: input, shape index: {}]
  %s9 = inlined_call_operand.vmem [shape: f32[1,128], index: 9, kind: input, shape index: {}]
  %s10 = inlined_call_operand.vmem [shape: bf16[128,128], index: 10, kind: input, shape index: {}]
  %s11 = inlined_call_operand.vmem [shape: f32[1,128], index: 11, kind: input, shape index: {}]
  %s12 = inlined_call_operand.vmem [shape: bf16[128,256], index: 12, kind: input, shape index: {}]
  %s13 = inlined_call_operand.vmem [shape: f32[1,256], index: 13, kind: input, shape index: {}]
  %s14 = inlined_call_operand.vmem [shape: f32[16,128], index: 14, kind: output, shape index: {}]
  %s15 = sld [smem:[#allocation0]]
  $region89: #{dan_forward_loss.1} parent=0
    _
  %s17 = ssub.s32 1, %s15
  %s18 = scalar_select 0, %s17, %s15
  loop: start=0, step=1, limit=4
  $region2: #{dan_forward_loss.1} parent=0 // loop_pre_header
    _
  $region3: #{dan_forward_loss.1} parent=0 // loop_header
    %s20 = sphi 0, %s24
    %p21 = scmp.ge.s32.totalorder %s20, 4
    %s30 = sphi 0, %s32
    %s33 = sphi 0, %s30
    %s34 = sphi 0, %s33
    %s50 = sphi 0, %s34
    %s56 = sphi 0, %s58
    %s59 = sphi 0, %s56
    %s60 = sphi 0, %s59
    %s76 = sphi 0, %s60
    %s82 = sphi 0, %s84
    %s85 = sphi 0, %s82
    %s86 = sphi 0, %s85
    %s102 = sphi 0, %s86
    %s108 = sphi 0, %s110
    %s111 = sphi 0, %s108
    %s112 = sphi 0, %s111
    %s128 = sphi 0, %s112
    %s132 = sphi 0, %s132
    %s134 = sphi 0, %s132
    %s135 = sphi 0, %s134
    %s149 = sphi 0, %s135
    %s153 = sphi 0, %s153
    %s155 = sphi 0, %s153
    %s156 = sphi 0, %s155
    %s170 = sphi 0, %s156
    %s174 = sphi 0, %s174
    %s176 = sphi 0, %s174
    %s177 = sphi 0, %s176
    %s191 = sphi 0, %s177
    %s195 = sphi 0, %s195
    %s197 = sphi 0, %s195
    %s198 = sphi 0, %s197
    %s212 = sphi 0, %s198
    %s216 = sphi 0, %s216
    %s218 = sphi 0, %s216
    %s219 = sphi 0, %s218
    %s233 = sphi 0, %s219
    %s237 = sphi 0, %s237
    %s239 = sphi 0, %s237
    %s240 = sphi 0, %s239
    %s254 = sphi 0, %s240
    %s258 = sphi 0, %s258
    %s260 = sphi 0, %s258
    %s261 = sphi 0, %s260
    %s275 = sphi 0, %s261
    %s279 = sphi 0, %s279
    %s281 = sphi 0, %s279
    %s282 = sphi 0, %s281
    %s296 = sphi 0, %s282
    %s300 = sphi 0, %s300
    %s302 = sphi 0, %s300
    %s303 = sphi 0, %s302
    %s317 = sphi 0, %s303
    %s321 = sphi 0, %s321
    %s323 = sphi 0, %s321
    %s324 = sphi 0, %s323
    %s338 = sphi 0, %s324
    %s344 = sphi 0, %s346
    %s347 = sphi 0, %s344
    %s348 = sphi 0, %s347
    %s364 = sphi 0, %s348
  $region4: #{dan_forward_loss.1} parent=0 // loop_header_branch
    %23 = sbr.rel (%p21) target = $region8
  $region5: #{dan_forward_loss.1} parent=0 // loop_body
    %s25 = ssub.s32 %s20, 1
    %s26 = ssub.s32 %s20, 2
    %s27 = sadd.s32 %s20, 1
    %s28 = ssub.s32 %s20, %s27
    %p29 = scmp.eq.s32.totalorder %s28, 0
    %s31 = sadd.s32 %s30, 1
    %s32 = scalar_select %p29, %s30, %s31
    %p35 = pneg %p29
    %p36 = scmp.eq.s32.totalorder %s20, 1
    %p37 = por %p35, %p36
    %p38 = scmp.ne.s32.totalorder %s30, %s33
    %p39 = scmp.eq.s32.totalorder %s20, 0
    %p40 = por %p38, %p39
    %p41 = scmp.ne.s32.totalorder %s30, %s33
    %p42 = scmp.eq.s32.totalorder %s25, 1
    %p43 = por %p41, %p42
    %p44 = scmp.ne.s32.totalorder %s33, %s34
    %p45 = scmp.eq.s32.totalorder %s25, 0
    %p46 = por %p44, %p45
    %p47 = scmp.ne.s32.totalorder %s33, %s34
    %p48 = scmp.eq.s32.totalorder %s26, 1
    %p49 = por %p47, %p48
    %p51 = scmp.ne.s32.totalorder %s34, %s50
    %p52 = scmp.eq.s32.totalorder %s26, 0
    %p53 = por %p51, %p52
    %s54 = ssub.s32 %s20, %s27
    %p55 = scmp.eq.s32.totalorder %s54, 0
    %s57 = sadd.s32 %s56, 1
    %s58 = scalar_select %p55, %s56, %s57
    %p61 = pneg %p55
    %p62 = scmp.eq.s32.totalorder %s20, 1
    %p63 = por %p61, %p62
    %p64 = scmp.ne.s32.totalorder %s56, %s59
    %p65 = scmp.eq.s32.totalorder %s20, 0
    %p66 = por %p64, %p65
    %p67 = scmp.ne.s32.totalorder %s56, %s59
    %p68 = scmp.eq.s32.totalorder %s25, 1
    %p69 = por %p67, %p68
    %p70 = scmp.ne.s32.totalorder %s59, %s60
    %p71 = scmp.eq.s32.totalorder %s25, 0
    %p72 = por %p70, %p71
    %p73 = scmp.ne.s32.totalorder %s59, %s60
    %p74 = scmp.eq.s32.totalorder %s26, 1
    %p75 = por %p73, %p74
    %p77 = scmp.ne.s32.totalorder %s60, %s76
    %p78 = scmp.eq.s32.totalorder %s26, 0
    %p79 = por %p77, %p78
    %s80 = ssub.s32 %s20, %s27
    %p81 = scmp.eq.s32.totalorder %s80, 0
    %s83 = sadd.s32 %s82, 1
    %s84 = scalar_select %p81, %s82, %s83
    %p87 = pneg %p81
    %p88 = scmp.eq.s32.totalorder %s20, 1
    %p89 = por %p87, %p88
    %p90 = scmp.ne.s32.totalorder %s82, %s85
    %p91 = scmp.eq.s32.totalorder %s20, 0
    %p92 = por %p90, %p91
    %p93 = scmp.ne.s32.totalorder %s82, %s85
    %p94 = scmp.eq.s32.totalorder %s25, 1
    %p95 = por %p93, %p94
    %p96 = scmp.ne.s32.totalorder %s85, %s86
    %p97 = scmp.eq.s32.totalorder %s25, 0
    %p98 = por %p96, %p97
    %p99 = scmp.ne.s32.totalorder %s85, %s86
    %p100 = scmp.eq.s32.totalorder %s26, 1
    %p101 = por %p99, %p100
    %p103 = scmp.ne.s32.totalorder %s86, %s102
    %p104 = scmp.eq.s32.totalorder %s26, 0
    %p105 = por %p103, %p104
    %s106 = ssub.s32 %s20, %s27
    %p107 = scmp.eq.s32.totalorder %s106, 0
    %s109 = sadd.s32 %s108, 1
    %s110 = scalar_select %p107, %s108, %s109
    %p113 = pneg %p107
    %p114 = scmp.eq.s32.totalorder %s20, 1
    %p115 = por %p113, %p114
    %p116 = scmp.ne.s32.totalorder %s108, %s111
    %p117 = scmp.eq.s32.totalorder %s20, 0
    %p118 = por %p116, %p117
    %p119 = scmp.ne.s32.totalorder %s108, %s111
    %p120 = scmp.eq.s32.totalorder %s25, 1
    %p121 = por %p119, %p120
    %p122 = scmp.ne.s32.totalorder %s111, %s112
    %p123 = scmp.eq.s32.totalorder %s25, 0
    %p124 = por %p122, %p123
    %p125 = scmp.ne.s32.totalorder %s111, %s112
    %p126 = scmp.eq.s32.totalorder %s26, 1
    %p127 = por %p125, %p126
    %p129 = scmp.ne.s32.totalorder %s112, %s128
    %p130 = scmp.eq.s32.totalorder %s26, 0
    %p131 = por %p129, %p130
    %s133 = sadd.s32 %s132, 1
    %p136 = scmp.eq.s32.totalorder %s20, 1
    %p137 = scmp.ne.s32.totalorder %s132, %s134
    %p138 = scmp.eq.s32.totalorder %s20, 0
    %p139 = por %p137, %p138
    %p140 = scmp.ne.s32.totalorder %s132, %s134
    %p141 = scmp.eq.s32.totalorder %s25, 1
    %p142 = por %p140, %p141
    %p143 = scmp.ne.s32.totalorder %s134, %s135
    %p144 = scmp.eq.s32.totalorder %s25, 0
    %p145 = por %p143, %p144
    %p146 = scmp.ne.s32.totalorder %s134, %s135
    %p147 = scmp.eq.s32.totalorder %s26, 1
    %p148 = por %p146, %p147
    %p150 = scmp.ne.s32.totalorder %s135, %s149
    %p151 = scmp.eq.s32.totalorder %s26, 0
    %p152 = por %p150, %p151
    %s154 = sadd.s32 %s153, 1
    %p157 = scmp.eq.s32.totalorder %s20, 1
    %p158 = scmp.ne.s32.totalorder %s153, %s155
    %p159 = scmp.eq.s32.totalorder %s20, 0
    %p160 = por %p158, %p159
    %p161 = scmp.ne.s32.totalorder %s153, %s155
    %p162 = scmp.eq.s32.totalorder %s25, 1
    %p163 = por %p161, %p162
    %p164 = scmp.ne.s32.totalorder %s155, %s156
    %p165 = scmp.eq.s32.totalorder %s25, 0
    %p166 = por %p164, %p165
    %p167 = scmp.ne.s32.totalorder %s155, %s156
    %p168 = scmp.eq.s32.totalorder %s26, 1
    %p169 = por %p167, %p168
    %p171 = scmp.ne.s32.totalorder %s156, %s170
    %p172 = scmp.eq.s32.totalorder %s26, 0
    %p173 = por %p171, %p172
    %s175 = sadd.s32 %s174, 1
    %p178 = scmp.eq.s32.totalorder %s20, 1
    %p179 = scmp.ne.s32.totalorder %s174, %s176
    %p180 = scmp.eq.s32.totalorder %s20, 0
    %p181 = por %p179, %p180
    %p182 = scmp.ne.s32.totalorder %s174, %s176
    %p183 = scmp.eq.s32.totalorder %s25, 1
    %p184 = por %p182, %p183
    %p185 = scmp.ne.s32.totalorder %s176, %s177
    %p186 = scmp.eq.s32.totalorder %s25, 0
    %p187 = por %p185, %p186
    %p188 = scmp.ne.s32.totalorder %s176, %s177
    %p189 = scmp.eq.s32.totalorder %s26, 1
    %p190 = por %p188, %p189
    %p192 = scmp.ne.s32.totalorder %s177, %s191
    %p193 = scmp.eq.s32.totalorder %s26, 0
    %p194 = por %p192, %p193
    %s196 = sadd.s32 %s195, 1
    %p199 = scmp.eq.s32.totalorder %s20, 1
    %p200 = scmp.ne.s32.totalorder %s195, %s197
    %p201 = scmp.eq.s32.totalorder %s20, 0
    %p202 = por %p200, %p201
    %p203 = scmp.ne.s32.totalorder %s195, %s197
    %p204 = scmp.eq.s32.totalorder %s25, 1
    %p205 = por %p203, %p204
    %p206 = scmp.ne.s32.totalorder %s197, %s198
    %p207 = scmp.eq.s32.totalorder %s25, 0
    %p208 = por %p206, %p207
    %p209 = scmp.ne.s32.totalorder %s197, %s198
    %p210 = scmp.eq.s32.totalorder %s26, 1
    %p211 = por %p209, %p210
    %p213 = scmp.ne.s32.totalorder %s198, %s212
    %p214 = scmp.eq.s32.totalorder %s26, 0
    %p215 = por %p213, %p214
    %s217 = sadd.s32 %s216, 1
    %p220 = scmp.eq.s32.totalorder %s20, 1
    %p221 = scmp.ne.s32.totalorder %s216, %s218
    %p222 = scmp.eq.s32.totalorder %s20, 0
    %p223 = por %p221, %p222
    %p224 = scmp.ne.s32.totalorder %s216, %s218
    %p225 = scmp.eq.s32.totalorder %s25, 1
    %p226 = por %p224, %p225
    %p227 = scmp.ne.s32.totalorder %s218, %s219
    %p228 = scmp.eq.s32.totalorder %s25, 0
    %p229 = por %p227, %p228
    %p230 = scmp.ne.s32.totalorder %s218, %s219
    %p231 = scmp.eq.s32.totalorder %s26, 1
    %p232 = por %p230, %p231
    %p234 = scmp.ne.s32.totalorder %s219, %s233
    %p235 = scmp.eq.s32.totalorder %s26, 0
    %p236 = por %p234, %p235
    %s238 = sadd.s32 %s237, 1
    %p241 = scmp.eq.s32.totalorder %s20, 1
    %p242 = scmp.ne.s32.totalorder %s237, %s239
    %p243 = scmp.eq.s32.totalorder %s20, 0
    %p244 = por %p242, %p243
    %p245 = scmp.ne.s32.totalorder %s237, %s239
    %p246 = scmp.eq.s32.totalorder %s25, 1
    %p247 = por %p245, %p246
    %p248 = scmp.ne.s32.totalorder %s239, %s240
    %p249 = scmp.eq.s32.totalorder %s25, 0
    %p250 = por %p248, %p249
    %p251 = scmp.ne.s32.totalorder %s239, %s240
    %p252 = scmp.eq.s32.totalorder %s26, 1
    %p253 = por %p251, %p252
    %p255 = scmp.ne.s32.totalorder %s240, %s254
    %p256 = scmp.eq.s32.totalorder %s26, 0
    %p257 = por %p255, %p256
    %s259 = sadd.s32 %s258, 1
    %p262 = scmp.eq.s32.totalorder %s20, 1
    %p263 = scmp.ne.s32.totalorder %s258, %s260
    %p264 = scmp.eq.s32.totalorder %s20, 0
    %p265 = por %p263, %p264
    %p266 = scmp.ne.s32.totalorder %s258, %s260
    %p267 = scmp.eq.s32.totalorder %s25, 1
    %p268 = por %p266, %p267
    %p269 = scmp.ne.s32.totalorder %s260, %s261
    %p270 = scmp.eq.s32.totalorder %s25, 0
    %p271 = por %p269, %p270
    %p272 = scmp.ne.s32.totalorder %s260, %s261
    %p273 = scmp.eq.s32.totalorder %s26, 1
    %p274 = por %p272, %p273
    %p276 = scmp.ne.s32.totalorder %s261, %s275
    %p277 = scmp.eq.s32.totalorder %s26, 0
    %p278 = por %p276, %p277
    %s280 = sadd.s32 %s279, 1
    %p283 = scmp.eq.s32.totalorder %s20, 1
    %p284 = scmp.ne.s32.totalorder %s279, %s281
    %p285 = scmp.eq.s32.totalorder %s20, 0
    %p286 = por %p284, %p285
    %p287 = scmp.ne.s32.totalorder %s279, %s281
    %p288 = scmp.eq.s32.totalorder %s25, 1
    %p289 = por %p287, %p288
    %p290 = scmp.ne.s32.totalorder %s281, %s282
    %p291 = scmp.eq.s32.totalorder %s25, 0
    %p292 = por %p290, %p291
    %p293 = scmp.ne.s32.totalorder %s281, %s282
    %p294 = scmp.eq.s32.totalorder %s26, 1
    %p295 = por %p293, %p294
    %p297 = scmp.ne.s32.totalorder %s282, %s296
    %p298 = scmp.eq.s32.totalorder %s26, 0
    %p299 = por %p297, %p298
    %s301 = sadd.s32 %s300, 1
    %p304 = scmp.eq.s32.totalorder %s20, 1
    %p305 = scmp.ne.s32.totalorder %s300, %s302
    %p306 = scmp.eq.s32.totalorder %s20, 0
    %p307 = por %p305, %p306
    %p308 = scmp.ne.s32.totalorder %s300, %s302
    %p309 = scmp.eq.s32.totalorder %s25, 1
    %p310 = por %p308, %p309
    %p311 = scmp.ne.s32.totalorder %s302, %s303
    %p312 = scmp.eq.s32.totalorder %s25, 0
    %p313 = por %p311, %p312
    %p314 = scmp.ne.s32.totalorder %s302, %s303
    %p315 = scmp.eq.s32.totalorder %s26, 1
    %p316 = por %p314, %p315
    %p318 = scmp.ne.s32.totalorder %s303, %s317
    %p319 = scmp.eq.s32.totalorder %s26, 0
    %p320 = por %p318, %p319
    %s322 = sadd.s32 %s321, 1
    %p325 = scmp.eq.s32.totalorder %s20, 1
    %p326 = scmp.ne.s32.totalorder %s321, %s323
    %p327 = scmp.eq.s32.totalorder %s20, 0
    %p328 = por %p326, %p327
    %p329 = scmp.ne.s32.totalorder %s321, %s323
    %p330 = scmp.eq.s32.totalorder %s25, 1
    %p331 = por %p329, %p330
    %p332 = scmp.ne.s32.totalorder %s323, %s324
    %p333 = scmp.eq.s32.totalorder %s25, 0
    %p334 = por %p332, %p333
    %p335 = scmp.ne.s32.totalorder %s323, %s324
    %p336 = scmp.eq.s32.totalorder %s26, 1
    %p337 = por %p335, %p336
    %p339 = scmp.ne.s32.totalorder %s324, %s338
    %p340 = scmp.eq.s32.totalorder %s26, 0
    %p341 = por %p339, %p340
    %s342 = ssub.s32 %s20, %s27
    %p343 = scmp.eq.s32.totalorder %s342, 0
    %s345 = sadd.s32 %s344, 1
    %s346 = scalar_select %p343, %s344, %s345
    %p349 = pneg %p343
    %p350 = scmp.eq.s32.totalorder %s20, 1
    %p351 = por %p349, %p350
    %p352 = scmp.ne.s32.totalorder %s344, %s347
    %p353 = scmp.eq.s32.totalorder %s20, 0
    %p354 = por %p352, %p353
    %p355 = scmp.ne.s32.totalorder %s344, %s347
    %p356 = scmp.eq.s32.totalorder %s25, 1
    %p357 = por %p355, %p356
    %p358 = scmp.ne.s32.totalorder %s347, %s348
    %p359 = scmp.eq.s32.totalorder %s25, 0
    %p360 = por %p358, %p359
    %p361 = scmp.ne.s32.totalorder %s347, %s348
    %p362 = scmp.eq.s32.totalorder %s26, 1
    %p363 = por %p361, %p362
    %p365 = scmp.ne.s32.totalorder %s348, %s364
    %p366 = scmp.eq.s32.totalorder %s26, 0
    %p367 = por %p365, %p366
    %p368 = scmp.le.s32.totalorder 1, %s20
    %p369 = scmp.lt.s32.totalorder %s20, 3
    %p370 = pnand %p368, %p369
    %p371 = pneg %p370
    // Predicated region
    $region9: #{dan_forward_loss.1} parent=5 // pred_check
      _
    $region10: #{dan_forward_loss.1} parent=5 // pred_check_branch
      %373 = sbr.rel (%p370) target = $region12
    $region11: #{dan_forward_loss.1} parent=5 // pred_region
      %s374 = ssub.s32 %s20, 1
      // Predicated region
      $region13: #{dan_forward_loss.1} parent=11 // pred_check
        %p375 = pneg %p145
      $region14: #{dan_forward_loss.1} parent=11 // pred_check_branch
        %377 = sbr.rel (%p375) target = $region16
      $region15: #{dan_forward_loss.1} parent=11 // pred_region
        _
      $region16: #{dan_forward_loss.1} parent=11 // pred_fallthru
        _
      // Predicated region
      $region17: #{dan_forward_loss.1} parent=11 // pred_check
        %p378 = pneg %p166
      $region18: #{dan_forward_loss.1} parent=11 // pred_check_branch
        %380 = sbr.rel (%p378) target = $region20
      $region19: #{dan_forward_loss.1} parent=11 // pred_region
        _
      $region20: #{dan_forward_loss.1} parent=11 // pred_fallthru
        _
      // Predicated region
      $region21: #{dan_forward_loss.1} parent=11 // pred_check
        %p381 = pneg %p187
      $region22: #{dan_forward_loss.1} parent=11 // pred_check_branch
        %383 = sbr.rel (%p381) target = $region24
      $region23: #{dan_forward_loss.1} parent=11 // pred_region
        _
      $region24: #{dan_forward_loss.1} parent=11 // pred_fallthru
        _
      // Predicated region
      $region25: #{dan_forward_loss.1} parent=11 // pred_check
        %p384 = pneg %p208
      $region26: #{dan_forward_loss.1} parent=11 // pred_check_branch
        %386 = sbr.rel (%p384) target = $region28
      $region27: #{dan_forward_loss.1} parent=11 // pred_region
        _
      $region28: #{dan_forward_loss.1} parent=11 // pred_fallthru
        _
      // Predicated region
      $region29: #{dan_forward_loss.1} parent=11 // pred_check
        %p387 = pneg %p229
      $region30: #{dan_forward_loss.1} parent=11 // pred_check_branch
        %389 = sbr.rel (%p387) target = $region32
      $region31: #{dan_forward_loss.1} parent=11 // pred_region
        _
      $region32: #{dan_forward_loss.1} parent=11 // pred_fallthru
        _
      // Predicated region
      $region33: #{dan_forward_loss.1} parent=11 // pred_check
        %p390 = pneg %p250
      $region34: #{dan_forward_loss.1} parent=11 // pred_check_branch
        %392 = sbr.rel (%p390) target = $region36
      $region35: #{dan_forward_loss.1} parent=11 // pred_region
        _
      $region36: #{dan_forward_loss.1} parent=11 // pred_fallthru
        _
      // Predicated region
      $region37: #{dan_forward_loss.1} parent=11 // pred_check
        %p393 = pneg %p271
      $region38: #{dan_forward_loss.1} parent=11 // pred_check_branch
        %395 = sbr.rel (%p393) target = $region40
      $region39: #{dan_forward_loss.1} parent=11 // pred_region
        _
      $region40: #{dan_forward_loss.1} parent=11 // pred_fallthru
        _
      // Predicated region
      $region41: #{dan_forward_loss.1} parent=11 // pred_check
        %p396 = pneg %p292
      $region42: #{dan_forward_loss.1} parent=11 // pred_check_branch
        %398 = sbr.rel (%p396) target = $region44
      $region43: #{dan_forward_loss.1} parent=11 // pred_region
        _
      $region44: #{dan_forward_loss.1} parent=11 // pred_fallthru
        _
      // Predicated region
      $region45: #{dan_forward_loss.1} parent=11 // pred_check
        %p399 = pneg %p313
      $region46: #{dan_forward_loss.1} parent=11 // pred_check_branch
        %401 = sbr.rel (%p399) target = $region48
      $region47: #{dan_forward_loss.1} parent=11 // pred_region
        _
      $region48: #{dan_forward_loss.1} parent=11 // pred_fallthru
        _
      // Predicated region
      $region49: #{dan_forward_loss.1} parent=11 // pred_check
        %p402 = pneg %p334
      $region50: #{dan_forward_loss.1} parent=11 // pred_check_branch
        %404 = sbr.rel (%p402) target = $region52
      $region51: #{dan_forward_loss.1} parent=11 // pred_region
        _
      $region52: #{dan_forward_loss.1} parent=11 // pred_fallthru
        _
    $region12: #{dan_forward_loss.1} parent=5 // pred_fallthru
      _
    %p405 = scmp.lt.s32.totalorder %s20, 2
    // Predicated region
    $region53: #{dan_forward_loss.1} parent=5 // pred_check
      %p406 = pneg %p405
    $region54: #{dan_forward_loss.1} parent=5 // pred_check_branch
      %408 = sbr.rel (%p406) target = $region56
    $region55: #{dan_forward_loss.1} parent=5 // pred_region
      // Predicated region
      $region57: #{dan_forward_loss.1} parent=55 // pred_check
        %p409 = pneg %p40
      $region58: #{dan_forward_loss.1} parent=55 // pred_check_branch
        %411 = sbr.rel (%p409) target = $region60
      $region59: #{dan_forward_loss.1} parent=55 // pred_region
        %s412 = smul.u32 2, %s20
        %p413 = scmp.lt.s32.totalorder %s412, 3
        %s414 = scalar_select %p413, %s412, 3
        %s415 = smul.addr %s414, 8
        %s416 = scalar_lea.vmem %s0, %s415
        %s417 = smul.u32 2, %s20
      $region60: #{dan_forward_loss.1} parent=55 // pred_fallthru
        _
      // Predicated region
      $region61: #{dan_forward_loss.1} parent=55 // pred_check
        %p418 = pneg %p66
      $region62: #{dan_forward_loss.1} parent=55 // pred_check_branch
        %420 = sbr.rel (%p418) target = $region64
      $region63: #{dan_forward_loss.1} parent=55 // pred_region
        %s421 = smul.u32 2, %s20
        %p422 = scmp.lt.s32.totalorder %s421, 3
        %s423 = scalar_select %p422, %s421, 3
        %s424 = smul.addr %s423, 8
        %s425 = scalar_lea.vmem %s1, %s424
        %s426 = smul.u32 2, %s20
      $region64: #{dan_forward_loss.1} parent=55 // pred_fallthru
        _
      // Predicated region
      $region65: #{dan_forward_loss.1} parent=55 // pred_check
        %p427 = pneg %p92
      $region66: #{dan_forward_loss.1} parent=55 // pred_check_branch
        %429 = sbr.rel (%p427) target = $region68
      $region67: #{dan_forward_loss.1} parent=55 // pred_region
        %s430 = smul.u32 2, %s20
        %p431 = scmp.lt.s32.totalorder %s430, 3
        %s432 = scalar_select %p431, %s430, 3
        %s433 = smul.addr %s432, 8
        %s434 = scalar_lea.vmem %s2, %s433
        %s435 = smul.u32 2, %s20
      $region68: #{dan_forward_loss.1} parent=55 // pred_fallthru
        _
      // Predicated region
      $region69: #{dan_forward_loss.1} parent=55 // pred_check
        %p436 = pneg %p118
      $region70: #{dan_forward_loss.1} parent=55 // pred_check_branch
        %438 = sbr.rel (%p436) target = $region72
      $region71: #{dan_forward_loss.1} parent=55 // pred_region
        %s439 = smul.u32 2, %s20
        %p440 = scmp.lt.s32.totalorder %s439, 3
        %s441 = scalar_select %p440, %s439, 3
        %s442 = smul.addr %s441, 8
        %s443 = scalar_lea.vmem %s3, %s442
        %s444 = smul.u32 2, %s20
      $region72: #{dan_forward_loss.1} parent=55 // pred_fallthru
        _
    $region56: #{dan_forward_loss.1} parent=5 // pred_fallthru
      _
    %p445 = scmp.le.s32.totalorder 1, %s20
    %p446 = scmp.lt.s32.totalorder %s20, 3
    %p447 = pnand %p445, %p446
    %p448 = pneg %p447
    // Predicated region
    $region73: #{dan_forward_loss.1} parent=5 // pred_check
      _
    $region74: #{dan_forward_loss.1} parent=5 // pred_check_branch
      %450 = sbr.rel (%p447) target = $region76
    $region75: #{dan_forward_loss.1} parent=5 // pred_region
      %s451 = ssub.s32 %s20, 1
      %s452 = smul.u32 2, %s25
      %p453 = scmp.lt.s32.totalorder %s452, 3
      %s454 = scalar_select %p453, %s452, 3
      %s455 = smul.addr %s454, 8
      %s456 = scalar_lea.vmem %s0, %s455
      %p457 = pneg %p46
      %p458 = pneg %p43
      %s459 = smul.u32 2, %s25
      %p460 = scmp.lt.s32.totalorder %s459, 3
      %s461 = scalar_select %p460, %s459, 3
      %s462 = smul.addr %s461, 8
      %s463 = scalar_lea.vmem %s1, %s462
      %p464 = pneg %p72
      %p465 = pneg %p69
      %s466 = smul.u32 2, %s25
      %p467 = scmp.lt.s32.totalorder %s466, 3
      %s468 = scalar_select %p467, %s466, 3
      %s469 = smul.addr %s468, 8
      %s470 = scalar_lea.vmem %s2, %s469
      %p471 = pneg %p98
      %p472 = pneg %p95
      %s473 = smul.u32 2, %s25
      %p474 = scmp.lt.s32.totalorder %s473, 3
      %s475 = scalar_select %p474, %s473, 3
      %s476 = smul.addr %s475, 8
      %s477 = scalar_lea.vmem %s3, %s476
      %p478 = pneg %p124
      %p479 = pneg %p121
      %p480 = pneg %p145
      %p481 = pneg %p142
      %p482 = pneg %p166
      %p483 = pneg %p163
      %p484 = pneg %p187
      %p485 = pneg %p184
      %p486 = pneg %p208
      %p487 = pneg %p205
      %p488 = pneg %p229
      %p489 = pneg %p226
      %p490 = pneg %p250
      %p491 = pneg %p247
      %p492 = pneg %p271
      %p493 = pneg %p268
      %p494 = pneg %p292
      %p495 = pneg %p289
      %p496 = pneg %p313
      %p497 = pneg %p310
      %p498 = pneg %p334
      %p499 = pneg %p331
      %p500 = pneg %p360
      %p501 = pneg %p357
      %p502 = scmp.lt.s32.totalorder %s25, 1
      %s503 = scalar_select %p502, %s25, 1
      %s504 = smul.addr %s503, 8
      %s505 = scalar_lea.vmem %s14, %s504
      %s506 = smul.u32 2, %s25
      %p507 = scmp.lt.s32.totalorder %s506, 3
      %s508 = scalar_select %p507, %s506, 3
      %s509 = smul.addr %s508, 8
      %s510 = scalar_lea.vmem %s0, %s509
      %s511 = smul.u32 2, %s25
      %s512 = smul.u32 2, %s25
      %p513 = scmp.lt.s32.totalorder %s512, 3
      %s514 = scalar_select %p513, %s512, 3
      %s515 = smul.addr %s514, 8
      %s516 = scalar_lea.vmem %s1, %s515
      %s517 = smul.u32 2, %s25
      %s518 = smul.u32 2, %s25
      %p519 = scmp.lt.s32.totalorder %s518, 3
      %s520 = scalar_select %p519, %s518, 3
      %s521 = smul.addr %s520, 8
      %s522 = scalar_lea.vmem %s2, %s521
      %s523 = smul.u32 2, %s25
      %s524 = smul.u32 2, %s25
      %p525 = scmp.lt.s32.totalorder %s524, 3
      %s526 = scalar_select %p525, %s524, 3
      %s527 = smul.addr %s526, 8
      %s528 = scalar_lea.vmem %s3, %s527
      %s529 = smul.u32 2, %s25
      %p530 = scmp.lt.s32.totalorder %s25, 1
      %s531 = scalar_select %p530, %s25, 1
      %s532 = smul.addr %s531, 8
      %s533 = scalar_lea.vmem %s14, %s532
      %v534 = vld [vmem:[%s510] sm:$0xff]
      %v535 = vld [vmem:[%s510 + $0x8] sm:$0xff]
      %v536 = vpack.c.bf16 %v535, %v534
      %v537 = vld [vmem:[%s516] sm:$0xff]
      %v538 = vld [vmem:[%s516 + $0x8] sm:$0xff]
      %v539 = vld [vmem:[%s522] sm:$0xff]
      %v540 = vld [vmem:[%s522 + $0x8] sm:$0xff]
      %v541 = vld [vmem:[%s4] sm:$0xf]
      %v542 = vld [vmem:[%s4 + $0x4] sm:$0xf]
      %v543 = vld [vmem:[%s4 + $0x8] sm:$0xf]
      %v544 = vld [vmem:[%s4 + $0xc] sm:$0xf]
      %v545 = vld [vmem:[%s4 + $0x10] sm:$0xf]
      %v546 = vld [vmem:[%s4 + $0x14] sm:$0xf]
      %v547 = vld [vmem:[%s4 + $0x18] sm:$0xf]
      %v548 = vld [vmem:[%s4 + $0x1c] sm:$0xf]
      %v549 = vld [vmem:[%s4 + $0x20] sm:$0xf]
      %v550 = vld [vmem:[%s4 + $0x24] sm:$0xf]
      %v551 = vld [vmem:[%s4 + $0x28] sm:$0xf]
      %v552 = vld [vmem:[%s4 + $0x2c] sm:$0xf]
      %v553 = vld [vmem:[%s4 + $0x30] sm:$0xf]
      %v554 = vld [vmem:[%s4 + $0x34] sm:$0xf]
      %v555 = vld [vmem:[%s4 + $0x38] sm:$0xf]
      %v556 = vld [vmem:[%s4 + $0x3c] sm:$0xf]
      %v557 = vld [vmem:[%s5] sm:$0x1]
      %v559 = vperm.slane %v557, 0
      %v577 = vunpack.c.l.b16 %v541
      %v578 = vunpack.c.l.b16 %v542
      %v579 = vunpack.c.l.b16 %v543
      %v580 = vunpack.c.l.b16 %v544
      %v581 = vunpack.c.l.b16 %v545
      %v582 = vunpack.c.l.b16 %v546
      %v583 = vunpack.c.l.b16 %v547
      %v584 = vunpack.c.l.b16 %v548
      %v585 = vunpack.c.l.b16 %v549
      %v586 = vunpack.c.l.b16 %v550
      %v587 = vunpack.c.l.b16 %v551
      %v588 = vunpack.c.l.b16 %v552
      %v589 = vunpack.c.l.b16 %v553
      %v590 = vunpack.c.l.b16 %v554
      %v591 = vunpack.c.l.b16 %v555
      %v592 = vunpack.c.l.b16 %v556
      %v593 = vpack.c.b16 %v578, %v577
      %v594 = vpack.c.b16 %v580, %v579
      %v595 = vpack.c.b16 %v582, %v581
      %v596 = vpack.c.b16 %v584, %v583
      %v597 = vpack.c.b16 %v586, %v585
      %v598 = vpack.c.b16 %v588, %v587
      %v599 = vpack.c.b16 %v590, %v589
      %v600 = vpack.c.b16 %v592, %v591
      %609 = vmatpush.bf16.msra.mxu0 %v600
      %610 = vmatpush.bf16.msra.mxu0 %v599
      %611 = vmatpush.bf16.msra.mxu0 %v598
      %612 = vmatpush.bf16.msra.mxu0 %v597
      %613 = vmatpush.bf16.msra.mxu0 %v596
      %614 = vmatpush.bf16.msra.mxu0 %v595
      %615 = vmatpush.bf16.msra.mxu0 %v594
      %616 = vmatpush.bf16.msra.mxu0 %v593
      %617 = vmatmul.bf16.gmra.mxu0 %v536
      %v618 = vpop.f32.mrf.mxu0
      %v619 = vadd.f32 %v559, %v618
      %v620 = vpop.f32.mrf.mxu0
      %v621 = vadd.f32 %v559, %v620
      %622 = vdwg.mxu0
      %vm623 = vcmp.ge.f32.partialorder %v619, 0.0
      %vm624 = vcmp.ge.f32.partialorder %v621, 0.0
      %v625 = vmul.f32 %v619, 0.01
      %v626 = vmul.f32 %v621, 0.01
      %v627 = vsel %vm623, %v619, %v625
      %v628 = vsel %vm624, %v621, %v626
      %v629 = vpack.c.bf16 %v628, %v627
      %v630 = vld [vmem:[%s6] sm:$0xf]
      %v631 = vld [vmem:[%s6 + $0x4] sm:$0xf]
      %v632 = vld [vmem:[%s6 + $0x8] sm:$0xf]
      %v633 = vld [vmem:[%s6 + $0xc] sm:$0xf]
      %v634 = vld [vmem:[%s6 + $0x10] sm:$0xf]
      %v635 = vld [vmem:[%s6 + $0x14] sm:$0xf]
      %v636 = vld [vmem:[%s6 + $0x18] sm:$0xf]
      %v637 = vld [vmem:[%s6 + $0x1c] sm:$0xf]
      %v638 = vld [vmem:[%s6 + $0x20] sm:$0xf]
      %v639 = vld [vmem:[%s6 + $0x24] sm:$0xf]
      %v640 = vld [vmem:[%s6 + $0x28] sm:$0xf]
      %v641 = vld [vmem:[%s6 + $0x2c] sm:$0xf]
      %v642 = vld [vmem:[%s6 + $0x30] sm:$0xf]
      %v643 = vld [vmem:[%s6 + $0x34] sm:$0xf]
      %v644 = vld [vmem:[%s6 + $0x38] sm:$0xf]
      %v645 = vld [vmem:[%s6 + $0x3c] sm:$0xf]
      %v646 = vld [vmem:[%s7] sm:$0x1]
      %v648 = vperm.slane %v646, 0
      %v666 = vunpack.c.l.b16 %v630
      %v667 = vunpack.c.l.b16 %v631
      %v668 = vunpack.c.l.b16 %v632
      %v669 = vunpack.c.l.b16 %v633
      %v670 = vunpack.c.l.b16 %v634
      %v671 = vunpack.c.l.b16 %v635
      %v672 = vunpack.c.l.b16 %v636
      %v673 = vunpack.c.l.b16 %v637
      %v674 = vunpack.c.l.b16 %v638
      %v675 = vunpack.c.l.b16 %v639
      %v676 = vunpack.c.l.b16 %v640
      %v677 = vunpack.c.l.b16 %v641
      %v678 = vunpack.c.l.b16 %v642
      %v679 = vunpack.c.l.b16 %v643
      %v680 = vunpack.c.l.b16 %v644
      %v681 = vunpack.c.l.b16 %v645
      %v682 = vpack.c.b16 %v667, %v666
      %v683 = vpack.c.b16 %v669, %v668
      %v684 = vpack.c.b16 %v671, %v670
      %v685 = vpack.c.b16 %v673, %v672
      %v686 = vpack.c.b16 %v675, %v674
      %v687 = vpack.c.b16 %v677, %v676
      %v688 = vpack.c.b16 %v679, %v678
      %v689 = vpack.c.b16 %v681, %v680
      %698 = vmatpush.bf16.msra.mxu0 %v689
      %699 = vmatpush.bf16.msra.mxu0 %v688
      %700 = vmatpush.bf16.msra.mxu0 %v687
      %701 = vmatpush.bf16.msra.mxu0 %v686
      %702 = vmatpush.bf16.msra.mxu0 %v685
      %703 = vmatpush.bf16.msra.mxu0 %v684
      %704 = vmatpush.bf16.msra.mxu0 %v683
      %705 = vmatpush.bf16.msra.mxu0 %v682
      %706 = vmatmul.bf16.gmra.mxu0 %v629
      %v707 = vpop.f32.mrf.mxu0
      %v708 = vadd.f32 %v648, %v707
      %v709 = vpop.f32.mrf.mxu0
      %v710 = vadd.f32 %v648, %v709
      %711 = vdwg.mxu0
      %vm712 = vcmp.ge.f32.partialorder %v708, 0.0
      %vm713 = vcmp.ge.f32.partialorder %v710, 0.0
      %v714 = vmul.f32 %v708, 0.01
      %v715 = vmul.f32 %v710, 0.01
      %v716 = vsel %vm712, %v708, %v714
      %v717 = vsel %vm713, %v710, %v715
      %v718 = vadd.f32 %v534, %v716
      %v719 = vadd.f32 %v535, %v717
      %v720 = vpack.c.bf16 %v719, %v718
      %v721 = vld [vmem:[%s8] sm:$0xf]
      %v722 = vld [vmem:[%s8 + $0x4] sm:$0xf]
      %v723 = vld [vmem:[%s8 + $0x8] sm:$0xf]
      %v724 = vld [vmem:[%s8 + $0xc] sm:$0xf]
      %v725 = vld [vmem:[%s8 + $0x10] sm:$0xf]
      %v726 = vld [vmem:[%s8 + $0x14] sm:$0xf]
      %v727 = vld [vmem:[%s8 + $0x18] sm:$0xf]
      %v728 = vld [vmem:[%s8 + $0x1c] sm:$0xf]
      %v729 = vld [vmem:[%s8 + $0x20] sm:$0xf]
      %v730 = vld [vmem:[%s8 + $0x24] sm:$0xf]
      %v731 = vld [vmem:[%s8 + $0x28] sm:$0xf]
      %v732 = vld [vmem:[%s8 + $0x2c] sm:$0xf]
      %v733 = vld [vmem:[%s8 + $0x30] sm:$0xf]
      %v734 = vld [vmem:[%s8 + $0x34] sm:$0xf]
      %v735 = vld [vmem:[%s8 + $0x38] sm:$0xf]
      %v736 = vld [vmem:[%s8 + $0x3c] sm:$0xf]
      %v737 = vld [vmem:[%s9] sm:$0x1]
      %v739 = vperm.slane %v737, 0
      %v757 = vunpack.c.l.b16 %v721
      %v758 = vunpack.c.l.b16 %v722
      %v759 = vunpack.c.l.b16 %v723
      %v760 = vunpack.c.l.b16 %v724
      %v761 = vunpack.c.l.b16 %v725
      %v762 = vunpack.c.l.b16 %v726
      %v763 = vunpack.c.l.b16 %v727
      %v764 = vunpack.c.l.b16 %v728
      %v765 = vunpack.c.l.b16 %v729
      %v766 = vunpack.c.l.b16 %v730
      %v767 = vunpack.c.l.b16 %v731
      %v768 = vunpack.c.l.b16 %v732
      %v769 = vunpack.c.l.b16 %v733
      %v770 = vunpack.c.l.b16 %v734
      %v771 = vunpack.c.l.b16 %v735
      %v772 = vunpack.c.l.b16 %v736
      %v773 = vpack.c.b16 %v758, %v757
      %v774 = vpack.c.b16 %v760, %v759
      %v775 = vpack.c.b16 %v762, %v761
      %v776 = vpack.c.b16 %v764, %v763
      %v777 = vpack.c.b16 %v766, %v765
      %v778 = vpack.c.b16 %v768, %v767
      %v779 = vpack.c.b16 %v770, %v769
      %v780 = vpack.c.b16 %v772, %v771
      %789 = vmatpush.bf16.msra.mxu0 %v780
      %790 = vmatpush.bf16.msra.mxu0 %v779
      %791 = vmatpush.bf16.msra.mxu0 %v778
      %792 = vmatpush.bf16.msra.mxu0 %v777
      %793 = vmatpush.bf16.msra.mxu0 %v776
      %794 = vmatpush.bf16.msra.mxu0 %v775
      %795 = vmatpush.bf16.msra.mxu0 %v774
      %796 = vmatpush.bf16.msra.mxu0 %v773
      %797 = vmatmul.bf16.gmra.mxu0 %v720
      %v798 = vpop.f32.mrf.mxu0
      %v799 = vadd.f32 %v739, %v798
      %v800 = vpop.f32.mrf.mxu0
      %v801 = vadd.f32 %v739, %v800
      %802 = vdwg.mxu0
      %vm803 = vcmp.ge.f32.partialorder %v799, 0.0
      %vm804 = vcmp.ge.f32.partialorder %v801, 0.0
      %v805 = vmul.f32 %v799, 0.01
      %v806 = vmul.f32 %v801, 0.01
      %v807 = vsel %vm803, %v799, %v805
      %v808 = vsel %vm804, %v801, %v806
      %v809 = vpack.c.bf16 %v808, %v807
      %v810 = vld [vmem:[%s10] sm:$0xf]
      %v811 = vld [vmem:[%s10 + $0x4] sm:$0xf]
      %v812 = vld [vmem:[%s10 + $0x8] sm:$0xf]
      %v813 = vld [vmem:[%s10 + $0xc] sm:$0xf]
      %v814 = vld [vmem:[%s10 + $0x10] sm:$0xf]
      %v815 = vld [vmem:[%s10 + $0x14] sm:$0xf]
      %v816 = vld [vmem:[%s10 + $0x18] sm:$0xf]
      %v817 = vld [vmem:[%s10 + $0x1c] sm:$0xf]
      %v818 = vld [vmem:[%s10 + $0x20] sm:$0xf]
      %v819 = vld [vmem:[%s10 + $0x24] sm:$0xf]
      %v820 = vld [vmem:[%s10 + $0x28] sm:$0xf]
      %v821 = vld [vmem:[%s10 + $0x2c] sm:$0xf]
      %v822 = vld [vmem:[%s10 + $0x30] sm:$0xf]
      %v823 = vld [vmem:[%s10 + $0x34] sm:$0xf]
      %v824 = vld [vmem:[%s10 + $0x38] sm:$0xf]
      %v825 = vld [vmem:[%s10 + $0x3c] sm:$0xf]
      %v826 = vld [vmem:[%s11] sm:$0x1]
      %v828 = vperm.slane %v826, 0
      %v846 = vunpack.c.l.b16 %v810
      %v847 = vunpack.c.l.b16 %v811
      %v848 = vunpack.c.l.b16 %v812
      %v849 = vunpack.c.l.b16 %v813
      %v850 = vunpack.c.l.b16 %v814
      %v851 = vunpack.c.l.b16 %v815
      %v852 = vunpack.c.l.b16 %v816
      %v853 = vunpack.c.l.b16 %v817
      %v854 = vunpack.c.l.b16 %v818
      %v855 = vunpack.c.l.b16 %v819
      %v856 = vunpack.c.l.b16 %v820
      %v857 = vunpack.c.l.b16 %v821
      %v858 = vunpack.c.l.b16 %v822
      %v859 = vunpack.c.l.b16 %v823
      %v860 = vunpack.c.l.b16 %v824
      %v861 = vunpack.c.l.b16 %v825
      %v862 = vpack.c.b16 %v847, %v846
      %v863 = vpack.c.b16 %v849, %v848
      %v864 = vpack.c.b16 %v851, %v850
      %v865 = vpack.c.b16 %v853, %v852
      %v866 = vpack.c.b16 %v855, %v854
      %v867 = vpack.c.b16 %v857, %v856
      %v868 = vpack.c.b16 %v859, %v858
      %v869 = vpack.c.b16 %v861, %v860
      %878 = vmatpush.bf16.msra.mxu0 %v869
      %879 = vmatpush.bf16.msra.mxu0 %v868
      %880 = vmatpush.bf16.msra.mxu0 %v867
      %881 = vmatpush.bf16.msra.mxu0 %v866
      %882 = vmatpush.bf16.msra.mxu0 %v865
      %883 = vmatpush.bf16.msra.mxu0 %v864
      %884 = vmatpush.bf16.msra.mxu0 %v863
      %885 = vmatpush.bf16.msra.mxu0 %v862
      %886 = vmatmul.bf16.gmra.mxu0 %v809
      %v887 = vpop.f32.mrf.mxu0
      %v888 = vadd.f32 %v828, %v887
      %v889 = vpop.f32.mrf.mxu0
      %v890 = vadd.f32 %v828, %v889
      %891 = vdwg.mxu0
      %vm892 = vcmp.ge.f32.partialorder %v888, 0.0
      %vm893 = vcmp.ge.f32.partialorder %v890, 0.0
      %v894 = vmul.f32 %v888, 0.01
      %v895 = vmul.f32 %v890, 0.01
      %v896 = vsel %vm892, %v888, %v894
      %v897 = vsel %vm893, %v890, %v895
      %v898 = vadd.f32 %v896, %v718
      %v899 = vadd.f32 %v897, %v719
      %v900 = vadd.f32 %v898, %v534
      %v901 = vadd.f32 %v899, %v535
      %v902 = vpack.c.bf16 %v901, %v900
      %v903 = vld [vmem:[%s12] sm:$0xff]
      %v904 = vld [vmem:[%s12 + $0x8] sm:$0xff]
      %v905 = vld [vmem:[%s12 + $0x10] sm:$0xff]
      %v906 = vld [vmem:[%s12 + $0x18] sm:$0xff]
      %v907 = vld [vmem:[%s12 + $0x20] sm:$0xff]
      %v908 = vld [vmem:[%s12 + $0x28] sm:$0xff]
      %v909 = vld [vmem:[%s12 + $0x30] sm:$0xff]
      %v910 = vld [vmem:[%s12 + $0x38] sm:$0xff]
      %v911 = vld [vmem:[%s12 + $0x40] sm:$0xff]
      %v912 = vld [vmem:[%s12 + $0x48] sm:$0xff]
      %v913 = vld [vmem:[%s12 + $0x50] sm:$0xff]
      %v914 = vld [vmem:[%s12 + $0x58] sm:$0xff]
      %v915 = vld [vmem:[%s12 + $0x60] sm:$0xff]
      %v916 = vld [vmem:[%s12 + $0x68] sm:$0xff]
      %v917 = vld [vmem:[%s12 + $0x70] sm:$0xff]
      %v918 = vld [vmem:[%s12 + $0x78] sm:$0xff]
      %v919 = vld [vmem:[%s13] sm:$0x3]
      %v921 = vperm.slane %v919, 0
      %v922 = vperm.slane %v919, 1
      %v941 = vunpack.c.l.b16 %v903
      %v942 = vunpack.c.h.b16 %v903
      %v943 = vunpack.c.l.b16 %v904
      %v944 = vunpack.c.h.b16 %v904
      %v945 = vunpack.c.l.b16 %v905
      %v946 = vunpack.c.h.b16 %v905
      %v947 = vunpack.c.l.b16 %v906
      %v948 = vunpack.c.h.b16 %v906
      %v949 = vunpack.c.l.b16 %v907
      %v950 = vunpack.c.h.b16 %v907
      %v951 = vunpack.c.l.b16 %v908
      %v952 = vunpack.c.h.b16 %v908
      %v953 = vunpack.c.l.b16 %v909
      %v954 = vunpack.c.h.b16 %v909
      %v955 = vunpack.c.l.b16 %v910
      %v956 = vunpack.c.h.b16 %v910
      %v957 = vunpack.c.l.b16 %v911
      %v958 = vunpack.c.h.b16 %v911
      %v959 = vunpack.c.l.b16 %v912
      %v960 = vunpack.c.h.b16 %v912
      %v961 = vunpack.c.l.b16 %v913
      %v962 = vunpack.c.h.b16 %v913
      %v963 = vunpack.c.l.b16 %v914
      %v964 = vunpack.c.h.b16 %v914
      %v965 = vunpack.c.l.b16 %v915
      %v966 = vunpack.c.h.b16 %v915
      %v967 = vunpack.c.l.b16 %v916
      %v968 = vunpack.c.h.b16 %v916
      %v969 = vunpack.c.l.b16 %v917
      %v970 = vunpack.c.h.b16 %v917
      %v971 = vunpack.c.l.b16 %v918
      %v972 = vunpack.c.h.b16 %v918
      %v973 = vpack.c.b16 %v943, %v941
      %v974 = vpack.c.b16 %v944, %v942
      %v975 = vpack.c.b16 %v947, %v945
      %v976 = vpack.c.b16 %v948, %v946
      %v977 = vpack.c.b16 %v951, %v949
      %v978 = vpack.c.b16 %v952, %v950
      %v979 = vpack.c.b16 %v955, %v953
      %v980 = vpack.c.b16 %v956, %v954
      %v981 = vpack.c.b16 %v959, %v957
      %v982 = vpack.c.b16 %v960, %v958
      %v983 = vpack.c.b16 %v963, %v961
      %v984 = vpack.c.b16 %v964, %v962
      %v985 = vpack.c.b16 %v967, %v965
      %v986 = vpack.c.b16 %v968, %v966
      %v987 = vpack.c.b16 %v971, %v969
      %v988 = vpack.c.b16 %v972, %v970
      %1005 = vmatpush.bf16.msra.mxu0 %v987
      %1006 = vmatpush.bf16.msra.mxu0 %v985
      %1007 = vmatpush.bf16.msra.mxu0 %v983
      %1008 = vmatpush.bf16.msra.mxu0 %v981
      %1009 = vmatpush.bf16.msra.mxu0 %v979
      %1010 = vmatpush.bf16.msra.mxu0 %v977
      %1011 = vmatpush.bf16.msra.mxu0 %v975
      %1012 = vmatpush.bf16.msra.mxu0 %v973
      %1013 = vmatmul.bf16.gmra.mxu0 %v902
      %v1014 = vpop.f32.mrf.mxu0
      %v1015 = vadd.f32 %v921, %v1014
      %v1016 = vpop.f32.mrf.mxu0
      %v1017 = vadd.f32 %v921, %v1016
      %1018 = vdwg.mxu0
      %1019 = vmatpush.bf16.msra.mxu0 %v988
      %1020 = vmatpush.bf16.msra.mxu0 %v986
      %1021 = vmatpush.bf16.msra.mxu0 %v984
      %1022 = vmatpush.bf16.msra.mxu0 %v982
      %1023 = vmatpush.bf16.msra.mxu0 %v980
      %1024 = vmatpush.bf16.msra.mxu0 %v978
      %1025 = vmatpush.bf16.msra.mxu0 %v976
      %1026 = vmatpush.bf16.msra.mxu0 %v974
      %1027 = vmatmul.bf16.gmra.mxu0 %v902
      %v1028 = vpop.f32.mrf.mxu0
      %v1029 = vadd.f32 %v922, %v1028
      %v1030 = vpop.f32.mrf.mxu0
      %v1031 = vadd.f32 %v922, %v1030
      %1032 = vdwg.mxu0
      %v1033 = vtanh.pop %v1029
      %v1034 = vtanh.pop %v1031
      %s1035 = smul.u32 %s25, 16
      %v1036 = vlaneseq
      %v1037 = vshrl.u32 %v1036, 7
      %v1038 = vadd.s32 %v1037, 8
      %v1039 = vstv %s1035
      %v1040 = vadd.s32 %v1039, %v1037
      %v1041 = vadd.s32 %v1039, %v1038
      %vm1042 = vcmp.lt.s32.totalorder %v1040, 32
      %vm1043 = vcmp.lt.s32.totalorder %v1041, 32
      %v1044 = vlaneseq
      %v1045 = vand.u32 %v1044, 127
      %vm1046 = vcmp.lt.s32.totalorder %v1045, 16
      %vm1047 = vcmp.lt.s32.totalorder %v1045, 8
      %v1048 = vsel %vm1042, 1, 0
      %v1049 = vsel %vm1043, 1, 0
      %v1050 = vcvt.s32.f32 %v1048
      %v1051 = vcvt.s32.f32 %v1049
      %v1052 = vsub.f32 %v900, %v537
      %v1053 = vsub.f32 %v901, %v538
      %v1054 = vmul.f32 %v1052, %v1052
      %v1055 = vmul.f32 %v1053, %v1053
      %vm1056 = vcmp.eq.s32.totalorder %v1048, 1
      %vm1057 = vcmp.eq.s32.totalorder %v1049, 1
      %v1058 = vsel %vm1056, %v1054, 0.0
      %v1059 = vsel %vm1057, %v1055, 0.0
      %v1060 = vadd.f32 %v1058, %v1059
      %1061 = vadd.xlane.f32.xlu0 %v1060
      %v1062 = vpop.xlane.xlu0 %1061
      %v1063 = vrot.slane %v1062, 4
      %v1064 = vadd.f32 %v1062, %v1063
      %v1065 = vrot.slane %v1064, 2
      %v1066 = vadd.f32 %v1064, %v1065
      %v1067 = vrot.slane %v1066, 1
      %v1068 = vadd.f32 %v1066, %v1067
      %s1069 = vtos %v1068
      %v1070 = vstv %s1069
      %v1071 = vsub.f32 %v1033, %v539
      %v1072 = vsub.f32 %v1034, %v540
      %v1073 = vmul.f32 %v1071, %v1071
      %v1074 = vmul.f32 %v1072, %v1072
      %v1075 = vsel %vm1056, %v1073, 0.0
      %v1076 = vsel %vm1057, %v1074, 0.0
      %v1077 = vadd.f32 %v1075, %v1076
      %1078 = vadd.xlane.f32.xlu0 %v1077
      %v1079 = vpop.xlane.xlu0 %1078
      %v1080 = vrot.slane %v1079, 4
      %v1081 = vadd.f32 %v1079, %v1080
      %v1082 = vrot.slane %v1081, 2
      %v1083 = vadd.f32 %v1081, %v1082
      %v1084 = vrot.slane %v1083, 1
      %v1085 = vadd.f32 %v1083, %v1084
      %s1086 = vtos %v1085
      %v1087 = vstv %s1086
      %v1088 = vld [vmem:[%s528] sm:$0xff]
      %v1089 = vld [vmem:[%s528 + $0x8] sm:$0xff]
      %vm1090 = vcmp.ge.s32.totalorder %v1088, 0
      %vm1091 = vcmp.ge.s32.totalorder %v1089, 0
      %v1092 = vsel %vm1090, 1, 0
      %v1093 = vsel %vm1091, 1, 0
      %v1094 = vcvt.s32.f32 %v1092
      %v1095 = vcvt.s32.f32 %v1093
      %v1096 = vmul.f32 %v1050, %v1094
      %v1097 = vmul.f32 %v1051, %v1095
      %1098 = vset.pattern.permute.xlu0 0
      %1099 = vperm.xlu0 %1098, %v1088
      %v1100 = vpop.permute.xlu0 %1099
      %1101 = vset.pattern.permute.xlu0 0
      %1102 = vperm.xlu0 %1101, %v1089
      %v1103 = vpop.permute.xlu0 %1102
      %vm1104 = vcmp.eq.s32.totalorder %v1045, %v1100
      %vm1105 = vcmp.eq.s32.totalorder %v1045, %v1103
      %v1106 = vsel %vm1104, 1.0, 0.0
      %v1107 = vsel %vm1105, 1.0, 0.0
      %1109 = vset.pattern.permute.xlu0 0
      %1110 = vperm.xlu0 %1109, %v1096
      %v1111 = vpop.permute.xlu0 %1110
      %1114 = vset.pattern.permute.xlu0 0
      %1115 = vperm.xlu0 %1114, %v1097
      %v1116 = vpop.permute.xlu0 %1115
      %v1118 = vmul.f32 %v1106, %v1111
      %v1119 = vmul.f32 %v1107, %v1116
      %v1120 = vmax.f32 %v1118, 0.0
      %v1121 = vmax.f32 %v1119, 0.0
      %v1122 = vmul.f32 %v1118, %v1015
      %v1123 = vmul.f32 %v1119, %v1017
      %1124 = vadd.xlane.f32.xlu0 %v1122
      %v1125 = vpop.xlane.xlu0 %1124
      %1126 = vadd.xlane.f32.xlu0 %v1123
      %v1127 = vpop.xlane.xlu0 %1126
      %1130 = vrot.lane.b32.xlu0 %v1094, 127
      %v1131 = vpop.permute.xlu0 %1130
      %1132 = vrot.lane.b32.xlu0 %v1095, 127
      %v1133 = vpop.permute.xlu0 %1132
      %v1136 = vmul.f32 %v1096, %v1131
      %v1137 = vmul.f32 %v1097, %v1133
      %1138 = vset.pattern.permute.xlu0 1
      %1139 = vperm.xlu0 %1138, %v1088
      %v1140 = vpop.permute.xlu0 %1139
      %1141 = vset.pattern.permute.xlu0 1
      %1142 = vperm.xlu0 %1141, %v1089
      %v1143 = vpop.permute.xlu0 %1142
      %vm1144 = vcmp.eq.s32.totalorder %v1045, %v1140
      %vm1145 = vcmp.eq.s32.totalorder %v1045, %v1143
      %v1146 = vsel %vm1144, 1.0, 0.0
      %v1147 = vsel %vm1145, 1.0, 0.0
      %1149 = vset.pattern.permute.xlu0 0
      %1150 = vperm.xlu0 %1149, %v1136
      %v1151 = vpop.permute.xlu0 %1150
      %1154 = vset.pattern.permute.xlu0 0
      %1155 = vperm.xlu0 %1154, %v1137
      %v1156 = vpop.permute.xlu0 %1155
      %v1158 = vmul.f32 %v1146, %v1151
      %v1159 = vmul.f32 %v1147, %v1156
      %v1160 = vmax.f32 %v1120, %v1158
      %v1161 = vmax.f32 %v1121, %v1159
      %v1162 = vmul.f32 %v1158, %v1015
      %v1163 = vmul.f32 %v1159, %v1017
      %1164 = vadd.xlane.f32.xlu0 %v1162
      %v1165 = vpop.xlane.xlu0 %1164
      %1166 = vadd.xlane.f32.xlu0 %v1163
      %v1167 = vpop.xlane.xlu0 %1166
      %1168 = vrot.lane.b32.xlu0 %v1094, 126
      %v1169 = vpop.permute.xlu0 %1168
      %1170 = vrot.lane.b32.xlu0 %v1095, 126
      %v1171 = vpop.permute.xlu0 %1170
      %v1174 = vmul.f32 %v1136, %v1169
      %v1175 = vmul.f32 %v1137, %v1171
      %1176 = vset.pattern.permute.xlu0 2
      %1177 = vperm.xlu0 %1176, %v1088
      %v1178 = vpop.permute.xlu0 %1177
      %1179 = vset.pattern.permute.xlu0 2
      %1180 = vperm.xlu0 %1179, %v1089
      %v1181 = vpop.permute.xlu0 %1180
      %vm1182 = vcmp.eq.s32.totalorder %v1045, %v1178
      %vm1183 = vcmp.eq.s32.totalorder %v1045, %v1181
      %v1184 = vsel %vm1182, 1.0, 0.0
      %v1185 = vsel %vm1183, 1.0, 0.0
      %1187 = vset.pattern.permute.xlu0 0
      %1188 = vperm.xlu0 %1187, %v1174
      %v1189 = vpop.permute.xlu0 %1188
      %1192 = vset.pattern.permute.xlu0 0
      %1193 = vperm.xlu0 %1192, %v1175
      %v1194 = vpop.permute.xlu0 %1193
      %v1196 = vmul.f32 %v1184, %v1189
      %v1197 = vmul.f32 %v1185, %v1194
      %v1198 = vmax.f32 %v1160, %v1196
      %v1199 = vmax.f32 %v1161, %v1197
      %v1200 = vmul.f32 %v1196, %v1015
      %v1201 = vmul.f32 %v1197, %v1017
      %1202 = vadd.xlane.f32.xlu0 %v1200
      %v1203 = vpop.xlane.xlu0 %1202
      %1204 = vadd.xlane.f32.xlu0 %v1201
      %v1205 = vpop.xlane.xlu0 %1204
      %1206 = vrot.lane.b32.xlu0 %v1094, 125
      %v1207 = vpop.permute.xlu0 %1206
      %1208 = vrot.lane.b32.xlu0 %v1095, 125
      %v1209 = vpop.permute.xlu0 %1208
      %v1212 = vmul.f32 %v1174, %v1207
      %v1213 = vmul.f32 %v1175, %v1209
      %1214 = vset.pattern.permute.xlu0 3
      %1215 = vperm.xlu0 %1214, %v1088
      %v1216 = vpop.permute.xlu0 %1215
      %1217 = vset.pattern.permute.xlu0 3
      %1218 = vperm.xlu0 %1217, %v1089
      %v1219 = vpop.permute.xlu0 %1218
      %vm1220 = vcmp.eq.s32.totalorder %v1045, %v1216
      %vm1221 = vcmp.eq.s32.totalorder %v1045, %v1219
      %v1222 = vsel %vm1220, 1.0, 0.0
      %v1223 = vsel %vm1221, 1.0, 0.0
      %1225 = vset.pattern.permute.xlu0 0
      %1226 = vperm.xlu0 %1225, %v1212
      %v1227 = vpop.permute.xlu0 %1226
      %1230 = vset.pattern.permute.xlu0 0
      %1231 = vperm.xlu0 %1230, %v1213
      %v1232 = vpop.permute.xlu0 %1231
      %v1234 = vmul.f32 %v1222, %v1227
      %v1235 = vmul.f32 %v1223, %v1232
      %v1236 = vmax.f32 %v1198, %v1234
      %v1237 = vmax.f32 %v1199, %v1235
      %v1238 = vmul.f32 %v1234, %v1015
      %v1239 = vmul.f32 %v1235, %v1017
      %1240 = vadd.xlane.f32.xlu0 %v1238
      %v1241 = vpop.xlane.xlu0 %1240
      %1242 = vadd.xlane.f32.xlu0 %v1239
      %v1243 = vpop.xlane.xlu0 %1242
      %1244 = vrot.lane.b32.xlu0 %v1094, 124
      %v1245 = vpop.permute.xlu0 %1244
      %1246 = vrot.lane.b32.xlu0 %v1095, 124
      %v1247 = vpop.permute.xlu0 %1246
      %v1250 = vmul.f32 %v1212, %v1245
      %v1251 = vmul.f32 %v1213, %v1247
      %1252 = vset.pattern.permute.xlu0 4
      %1253 = vperm.xlu0 %1252, %v1088
      %v1254 = vpop.permute.xlu0 %1253
      %1255 = vset.pattern.permute.xlu0 4
      %1256 = vperm.xlu0 %1255, %v1089
      %v1257 = vpop.permute.xlu0 %1256
      %vm1258 = vcmp.eq.s32.totalorder %v1045, %v1254
      %vm1259 = vcmp.eq.s32.totalorder %v1045, %v1257
      %v1260 = vsel %vm1258, 1.0, 0.0
      %v1261 = vsel %vm1259, 1.0, 0.0
      %1263 = vset.pattern.permute.xlu0 0
      %1264 = vperm.xlu0 %1263, %v1250
      %v1265 = vpop.permute.xlu0 %1264
      %1268 = vset.pattern.permute.xlu0 0
      %1269 = vperm.xlu0 %1268, %v1251
      %v1270 = vpop.permute.xlu0 %1269
      %v1272 = vmul.f32 %v1260, %v1265
      %v1273 = vmul.f32 %v1261, %v1270
      %v1274 = vmax.f32 %v1236, %v1272
      %v1275 = vmax.f32 %v1237, %v1273
      %v1276 = vmul.f32 %v1272, %v1015
      %v1277 = vmul.f32 %v1273, %v1017
      %1278 = vadd.xlane.f32.xlu0 %v1276
      %v1279 = vpop.xlane.xlu0 %1278
      %1280 = vadd.xlane.f32.xlu0 %v1277
      %v1281 = vpop.xlane.xlu0 %1280
      %1282 = vrot.lane.b32.xlu0 %v1094, 123
      %v1283 = vpop.permute.xlu0 %1282
      %1284 = vrot.lane.b32.xlu0 %v1095, 123
      %v1285 = vpop.permute.xlu0 %1284
      %v1288 = vmul.f32 %v1250, %v1283
      %v1289 = vmul.f32 %v1251, %v1285
      %1290 = vset.pattern.permute.xlu0 5
      %1291 = vperm.xlu0 %1290, %v1088
      %v1292 = vpop.permute.xlu0 %1291
      %1293 = vset.pattern.permute.xlu0 5
      %1294 = vperm.xlu0 %1293, %v1089
      %v1295 = vpop.permute.xlu0 %1294
      %vm1296 = vcmp.eq.s32.totalorder %v1045, %v1292
      %vm1297 = vcmp.eq.s32.totalorder %v1045, %v1295
      %v1298 = vsel %vm1296, 1.0, 0.0
      %v1299 = vsel %vm1297, 1.0, 0.0
      %1301 = vset.pattern.permute.xlu0 0
      %1302 = vperm.xlu0 %1301, %v1288
      %v1303 = vpop.permute.xlu0 %1302
      %1306 = vset.pattern.permute.xlu0 0
      %1307 = vperm.xlu0 %1306, %v1289
      %v1308 = vpop.permute.xlu0 %1307
      %v1310 = vmul.f32 %v1298, %v1303
      %v1311 = vmul.f32 %v1299, %v1308
      %v1312 = vmax.f32 %v1274, %v1310
      %v1313 = vmax.f32 %v1275, %v1311
      %v1314 = vmul.f32 %v1310, %v1015
      %v1315 = vmul.f32 %v1311, %v1017
      %1316 = vadd.xlane.f32.xlu0 %v1314
      %v1317 = vpop.xlane.xlu0 %1316
      %1318 = vadd.xlane.f32.xlu0 %v1315
      %v1319 = vpop.xlane.xlu0 %1318
      %1320 = vrot.lane.b32.xlu0 %v1094, 122
      %v1321 = vpop.permute.xlu0 %1320
      %1322 = vrot.lane.b32.xlu0 %v1095, 122
      %v1323 = vpop.permute.xlu0 %1322
      %v1326 = vmul.f32 %v1288, %v1321
      %v1327 = vmul.f32 %v1289, %v1323
      %1328 = vset.pattern.permute.xlu0 6
      %1329 = vperm.xlu0 %1328, %v1088
      %v1330 = vpop.permute.xlu0 %1329
      %1331 = vset.pattern.permute.xlu0 6
      %1332 = vperm.xlu0 %1331, %v1089
      %v1333 = vpop.permute.xlu0 %1332
      %vm1334 = vcmp.eq.s32.totalorder %v1045, %v1330
      %vm1335 = vcmp.eq.s32.totalorder %v1045, %v1333
      %v1336 = vsel %vm1334, 1.0, 0.0
      %v1337 = vsel %vm1335, 1.0, 0.0
      %1339 = vset.pattern.permute.xlu0 0
      %1340 = vperm.xlu0 %1339, %v1326
      %v1341 = vpop.permute.xlu0 %1340
      %1344 = vset.pattern.permute.xlu0 0
      %1345 = vperm.xlu0 %1344, %v1327
      %v1346 = vpop.permute.xlu0 %1345
      %v1348 = vmul.f32 %v1336, %v1341
      %v1349 = vmul.f32 %v1337, %v1346
      %v1350 = vmax.f32 %v1312, %v1348
      %v1351 = vmax.f32 %v1313, %v1349
      %v1352 = vmul.f32 %v1348, %v1015
      %v1353 = vmul.f32 %v1349, %v1017
      %1354 = vadd.xlane.f32.xlu0 %v1352
      %v1355 = vpop.xlane.xlu0 %1354
      %1356 = vadd.xlane.f32.xlu0 %v1353
      %v1357 = vpop.xlane.xlu0 %1356
      %1358 = vrot.lane.b32.xlu0 %v1094, 121
      %v1359 = vpop.permute.xlu0 %1358
      %1360 = vrot.lane.b32.xlu0 %v1095, 121
      %v1361 = vpop.permute.xlu0 %1360
      %v1364 = vmul.f32 %v1326, %v1359
      %v1365 = vmul.f32 %v1327, %v1361
      %1366 = vset.pattern.permute.xlu0 7
      %1367 = vperm.xlu0 %1366, %v1088
      %v1368 = vpop.permute.xlu0 %1367
      %1369 = vset.pattern.permute.xlu0 7
      %1370 = vperm.xlu0 %1369, %v1089
      %v1371 = vpop.permute.xlu0 %1370
      %vm1372 = vcmp.eq.s32.totalorder %v1045, %v1368
      %vm1373 = vcmp.eq.s32.totalorder %v1045, %v1371
      %v1374 = vsel %vm1372, 1.0, 0.0
      %v1375 = vsel %vm1373, 1.0, 0.0
      %1377 = vset.pattern.permute.xlu0 0
      %1378 = vperm.xlu0 %1377, %v1364
      %v1379 = vpop.permute.xlu0 %1378
      %1382 = vset.pattern.permute.xlu0 0
      %1383 = vperm.xlu0 %1382, %v1365
      %v1384 = vpop.permute.xlu0 %1383
      %v1386 = vmul.f32 %v1374, %v1379
      %v1387 = vmul.f32 %v1375, %v1384
      %v1388 = vmax.f32 %v1350, %v1386
      %v1389 = vmax.f32 %v1351, %v1387
      %v1390 = vmul.f32 %v1386, %v1015
      %v1391 = vmul.f32 %v1387, %v1017
      %1392 = vadd.xlane.f32.xlu0 %v1390
      %v1393 = vpop.xlane.xlu0 %1392
      %1394 = vadd.xlane.f32.xlu0 %v1391
      %v1395 = vpop.xlane.xlu0 %1394
      %v1396 = vsub.f32 1.0, %v1388
      %v1397 = vsub.f32 1.0, %v1389
      %v1398 = vsel %vm1047, 1, 0
      %vm1399 = vcmp.eq.s32.totalorder %v1398, 1
      %v1400 = vsel %vm1399, %v1396, 0.0
      %v1401 = vsel %vm1399, %v1397, 0.0
      %v1402 = vsub.f32 1.0, %v1125
      %v1403 = vsub.f32 1.0, %v1127
      %v1404 = vadd.f32 %v1402, %v1015
      %v1405 = vadd.f32 %v1403, %v1017
      %v1406 = vmax.f32 %v1404, 0.0
      %v1407 = vmax.f32 %v1405, 0.0
      %v1408 = vmul.f32 %v1406, %v1400
      %v1409 = vmul.f32 %v1407, %v1401
      %v1410 = vmul.f32 %v1408, %v1111
      %v1411 = vmul.f32 %v1409, %v1116
      %v1412 = vadd.f32 %v1410, %v1411
      %1413 = vadd.xlane.f32.xlu0 %v1412
      %v1414 = vpop.xlane.xlu0 %1413
      %v1415 = vrot.slane %v1414, 4
      %v1416 = vadd.f32 %v1414, %v1415
      %v1417 = vrot.slane %v1416, 2
      %v1418 = vadd.f32 %v1416, %v1417
      %v1419 = vrot.slane %v1418, 1
      %v1420 = vadd.f32 %v1418, %v1419
      %s1421 = vtos %v1420
      %v1422 = vstv %s1421
      %v1423 = vadd.f32 %v1422, 0.0
      %v1424 = vsub.f32 1.0, %v1165
      %v1425 = vsub.f32 1.0, %v1167
      %v1426 = vadd.f32 %v1424, %v1015
      %v1427 = vadd.f32 %v1425, %v1017
      %v1428 = vmax.f32 %v1426, 0.0
      %v1429 = vmax.f32 %v1427, 0.0
      %v1430 = vmul.f32 %v1428, %v1400
      %v1431 = vmul.f32 %v1429, %v1401
      %v1432 = vmul.f32 %v1430, %v1151
      %v1433 = vmul.f32 %v1431, %v1156
      %v1434 = vadd.f32 %v1432, %v1433
      %1435 = vadd.xlane.f32.xlu0 %v1434
      %v1436 = vpop.xlane.xlu0 %1435
      %v1437 = vrot.slane %v1436, 4
      %v1438 = vadd.f32 %v1436, %v1437
      %v1439 = vrot.slane %v1438, 2
      %v1440 = vadd.f32 %v1438, %v1439
      %v1441 = vrot.slane %v1440, 1
      %v1442 = vadd.f32 %v1440, %v1441
      %s1443 = vtos %v1442
      %v1444 = vstv %s1443
      %v1445 = vadd.f32 %v1423, %v1444
      %v1446 = vsub.f32 1.0, %v1203
      %v1447 = vsub.f32 1.0, %v1205
      %v1448 = vadd.f32 %v1446, %v1015
      %v1449 = vadd.f32 %v1447, %v1017
      %v1450 = vmax.f32 %v1448, 0.0
      %v1451 = vmax.f32 %v1449, 0.0
      %v1452 = vmul.f32 %v1450, %v1400
      %v1453 = vmul.f32 %v1451, %v1401
      %v1454 = vmul.f32 %v1452, %v1189
      %v1455 = vmul.f32 %v1453, %v1194
      %v1456 = vadd.f32 %v1454, %v1455
      %1457 = vadd.xlane.f32.xlu0 %v1456
      %v1458 = vpop.xlane.xlu0 %1457
      %v1459 = vrot.slane %v1458, 4
      %v1460 = vadd.f32 %v1458, %v1459
      %v1461 = vrot.slane %v1460, 2
      %v1462 = vadd.f32 %v1460, %v1461
      %v1463 = vrot.slane %v1462, 1
      %v1464 = vadd.f32 %v1462, %v1463
      %s1465 = vtos %v1464
      %v1466 = vstv %s1465
      %v1467 = vadd.f32 %v1445, %v1466
      %v1468 = vsub.f32 1.0, %v1241
      %v1469 = vsub.f32 1.0, %v1243
      %v1470 = vadd.f32 %v1468, %v1015
      %v1471 = vadd.f32 %v1469, %v1017
      %v1472 = vmax.f32 %v1470, 0.0
      %v1473 = vmax.f32 %v1471, 0.0
      %v1474 = vmul.f32 %v1472, %v1400
      %v1475 = vmul.f32 %v1473, %v1401
      %v1476 = vmul.f32 %v1474, %v1227
      %v1477 = vmul.f32 %v1475, %v1232
      %v1478 = vadd.f32 %v1476, %v1477
      %1479 = vadd.xlane.f32.xlu0 %v1478
      %v1480 = vpop.xlane.xlu0 %1479
      %v1481 = vrot.slane %v1480, 4
      %v1482 = vadd.f32 %v1480, %v1481
      %v1483 = vrot.slane %v1482, 2
      %v1484 = vadd.f32 %v1482, %v1483
      %v1485 = vrot.slane %v1484, 1
      %v1486 = vadd.f32 %v1484, %v1485
      %s1487 = vtos %v1486
      %v1488 = vstv %s1487
      %v1489 = vadd.f32 %v1467, %v1488
      %v1490 = vsub.f32 1.0, %v1279
      %v1491 = vsub.f32 1.0, %v1281
      %v1492 = vadd.f32 %v1490, %v1015
      %v1493 = vadd.f32 %v1491, %v1017
      %v1494 = vmax.f32 %v1492, 0.0
      %v1495 = vmax.f32 %v1493, 0.0
      %v1496 = vmul.f32 %v1494, %v1400
      %v1497 = vmul.f32 %v1495, %v1401
      %v1498 = vmul.f32 %v1496, %v1265
      %v1499 = vmul.f32 %v1497, %v1270
      %v1500 = vadd.f32 %v1498, %v1499
      %1501 = vadd.xlane.f32.xlu0 %v1500
      %v1502 = vpop.xlane.xlu0 %1501
      %v1503 = vrot.slane %v1502, 4
      %v1504 = vadd.f32 %v1502, %v1503
      %v1505 = vrot.slane %v1504, 2
      %v1506 = vadd.f32 %v1504, %v1505
      %v1507 = vrot.slane %v1506, 1
      %v1508 = vadd.f32 %v1506, %v1507
      %s1509 = vtos %v1508
      %v1510 = vstv %s1509
      %v1511 = vadd.f32 %v1489, %v1510
      %v1512 = vsub.f32 1.0, %v1317
      %v1513 = vsub.f32 1.0, %v1319
      %v1514 = vadd.f32 %v1512, %v1015
      %v1515 = vadd.f32 %v1513, %v1017
      %v1516 = vmax.f32 %v1514, 0.0
      %v1517 = vmax.f32 %v1515, 0.0
      %v1518 = vmul.f32 %v1516, %v1400
      %v1519 = vmul.f32 %v1517, %v1401
      %v1520 = vmul.f32 %v1518, %v1303
      %v1521 = vmul.f32 %v1519, %v1308
      %v1522 = vadd.f32 %v1520, %v1521
      %1523 = vadd.xlane.f32.xlu0 %v1522
      %v1524 = vpop.xlane.xlu0 %1523
      %v1525 = vrot.slane %v1524, 4
      %v1526 = vadd.f32 %v1524, %v1525
      %v1527 = vrot.slane %v1526, 2
      %v1528 = vadd.f32 %v1526, %v1527
      %v1529 = vrot.slane %v1528, 1
      %v1530 = vadd.f32 %v1528, %v1529
      %s1531 = vtos %v1530
      %v1532 = vstv %s1531
      %v1533 = vadd.f32 %v1511, %v1532
      %v1534 = vsub.f32 1.0, %v1355
      %v1535 = vsub.f32 1.0, %v1357
      %v1536 = vadd.f32 %v1534, %v1015
      %v1537 = vadd.f32 %v1535, %v1017
      %v1538 = vmax.f32 %v1536, 0.0
      %v1539 = vmax.f32 %v1537, 0.0
      %v1540 = vmul.f32 %v1538, %v1400
      %v1541 = vmul.f32 %v1539, %v1401
      %v1542 = vmul.f32 %v1540, %v1341
      %v1543 = vmul.f32 %v1541, %v1346
      %v1544 = vadd.f32 %v1542, %v1543
      %1545 = vadd.xlane.f32.xlu0 %v1544
      %v1546 = vpop.xlane.xlu0 %1545
      %v1547 = vrot.slane %v1546, 4
      %v1548 = vadd.f32 %v1546, %v1547
      %v1549 = vrot.slane %v1548, 2
      %v1550 = vadd.f32 %v1548, %v1549
      %v1551 = vrot.slane %v1550, 1
      %v1552 = vadd.f32 %v1550, %v1551
      %s1553 = vtos %v1552
      %v1554 = vstv %s1553
      %v1555 = vadd.f32 %v1533, %v1554
      %v1556 = vsub.f32 1.0, %v1393
      %v1557 = vsub.f32 1.0, %v1395
      %v1558 = vadd.f32 %v1556, %v1015
      %v1559 = vadd.f32 %v1557, %v1017
      %v1560 = vmax.f32 %v1558, 0.0
      %v1561 = vmax.f32 %v1559, 0.0
      %v1562 = vmul.f32 %v1560, %v1400
      %v1563 = vmul.f32 %v1561, %v1401
      %v1564 = vmul.f32 %v1562, %v1379
      %v1565 = vmul.f32 %v1563, %v1384
      %v1566 = vadd.f32 %v1564, %v1565
      %1567 = vadd.xlane.f32.xlu0 %v1566
      %v1568 = vpop.xlane.xlu0 %1567
      %v1569 = vrot.slane %v1568, 4
      %v1570 = vadd.f32 %v1568, %v1569
      %v1571 = vrot.slane %v1570, 2
      %v1572 = vadd.f32 %v1570, %v1571
      %v1573 = vrot.slane %v1572, 1
      %v1574 = vadd.f32 %v1572, %v1573
      %s1575 = vtos %v1574
      %v1576 = vstv %s1575
      %v1577 = vadd.f32 %v1555, %v1576
      %v1578 = vsel %vm1046, 1, 0
      %vm1579 = vcmp.eq.s32.totalorder %v1578, 1
      %v1580 = vsel %vm1579, %v1033, -1e+30
      %v1581 = vsel %vm1579, %v1034, -1e+30
      %1582 = vmax.xlane.f32.xlu0 %v1580
      %v1583 = vpop.xlane.xlu0 %1582
      %1584 = vmax.xlane.f32.xlu0 %v1581
      %v1585 = vpop.xlane.xlu0 %1584
      %v1586 = vsub.f32 %v1033, %v1583
      %v1587 = vsub.f32 %v1034, %v1585
      %v1588 = vmul.f32 %v1586, 1.442695
      %v1589 = vpow.pop %v1588
      %v1590 = vmul.f32 %v1587, 1.442695
      %v1591 = vpow.pop %v1590
      %v1592 = vsel %vm1579, %v1589, 0.0
      %v1593 = vsel %vm1579, %v1591, 0.0
      %1594 = vadd.xlane.f32.xlu0 %v1592
      %v1595 = vpop.xlane.xlu0 %1594
      %1596 = vadd.xlane.f32.xlu0 %v1593
      %v1597 = vpop.xlane.xlu0 %1596
      %v1598 = vlog2.pop %v1595
      %v1599 = vmul.f32 %v1598, 0.6931472
      %v1600 = vlog2.pop %v1597
      %v1601 = vmul.f32 %v1600, 0.6931472
      %v1602 = vadd.f32 %v1599, %v1583
      %v1603 = vadd.f32 %v1601, %v1585
      %v1604 = vsub.f32 %v1033, %v1602
      %v1605 = vsub.f32 %v1034, %v1603
      %v1606 = vsel %vm1579, %v539, -1e+30
      %v1607 = vsel %vm1579, %v540, -1e+30
      %1608 = vmax.xlane.f32.xlu0 %v1606
      %v1609 = vpop.xlane.xlu0 %1608
      %1610 = vmax.xlane.f32.xlu0 %v1607
      %v1611 = vpop.xlane.xlu0 %1610
      %v1612 = vsub.f32 %v539, %v1609
      %v1613 = vsub.f32 %v540, %v1611
      %v1614 = vmul.f32 %v1612, 1.442695
      %v1615 = vpow.pop %v1614
      %v1616 = vmul.f32 %v1613, 1.442695
      %v1617 = vpow.pop %v1616
      %v1618 = vsel %vm1579, %v1615, 0.0
      %v1619 = vsel %vm1579, %v1617, 0.0
      %1620 = vadd.xlane.f32.xlu0 %v1618
      %v1621 = vpop.xlane.xlu0 %1620
      %1622 = vadd.xlane.f32.xlu0 %v1619
      %v1623 = vpop.xlane.xlu0 %1622
      %v1624 = vrcp.pop %v1621
      %v1625 = vmul.f32 %v1621, %v1624
      %v1626 = vsub.f32 1.0, %v1625
      %v1627 = vmul.f32 %v1624, %v1626
      %v1628 = vadd.f32 %v1624, %v1627
      %vm1629 = vweird.f32 %v1621
      %vm1630 = vweird.f32 %v1624
      %vm1631 = vmor %vm1629, %vm1630
      %v1632 = vsel %vm1631, %v1624, %v1628
      %v1633 = vand.u32 2147483647, %v1621
      %vm1634 = vcmp.eq.f32.partialorder %v1633, 8.507059e+37
      %v1635 = vand.u32 %v1621, 2147483648
      %v1636 = vor.u32 1.1754944e-38, %v1635
      %v1637 = vsel %vm1634, %v1636, %v1632
      %v1638 = vmul.f32 %v1618, %v1637
      %v1639 = vrcp.pop %v1623
      %v1640 = vmul.f32 %v1623, %v1639
      %v1641 = vsub.f32 1.0, %v1640
      %v1642 = vmul.f32 %v1639, %v1641
      %v1643 = vadd.f32 %v1639, %v1642
      %vm1644 = vweird.f32 %v1623
      %vm1645 = vweird.f32 %v1639
      %vm1646 = vmor %vm1644, %vm1645
      %v1647 = vsel %vm1646, %v1639, %v1643
      %v1648 = vand.u32 2147483647, %v1623
      %vm1649 = vcmp.eq.f32.partialorder %v1648, 8.507059e+37
      %v1650 = vand.u32 %v1623, 2147483648
      %v1651 = vor.u32 1.1754944e-38, %v1650
      %v1652 = vsel %vm1649, %v1651, %v1647
      %v1653 = vmul.f32 %v1619, %v1652
      %v1654 = vlog2.pop %v1621
      %v1655 = vmul.f32 %v1654, 0.6931472
      %v1656 = vlog2.pop %v1623
      %v1657 = vmul.f32 %v1656, 0.6931472
      %v1658 = vsub.f32 %v1612, %v1655
      %v1659 = vsub.f32 %v1613, %v1657
      %vm1660 = vmand %vm1056, %vm1579
      %vm1661 = vmand %vm1057, %vm1579
      %v1662 = vsub.f32 %v1658, %v1604
      %v1663 = vsub.f32 %v1659, %v1605
      %v1664 = vmul.f32 %v1638, %v1662
      %v1665 = vmul.f32 %v1653, %v1663
      %v1666 = vsel %vm1660, %v1664, 0.0
      %v1667 = vsel %vm1661, %v1665, 0.0
      %v1668 = vadd.f32 %v1666, %v1667
      %1669 = vadd.xlane.f32.xlu0 %v1668
      %v1670 = vpop.xlane.xlu0 %1669
      %v1671 = vrot.slane %v1670, 4
      %v1672 = vadd.f32 %v1670, %v1671
      %v1673 = vrot.slane %v1672, 2
      %v1674 = vadd.f32 %v1672, %v1673
      %v1675 = vrot.slane %v1674, 1
      %v1676 = vadd.f32 %v1674, %v1675
      %s1677 = vtos %v1676
      %v1678 = vstv %s1677
      %v1679 = vrcp.pop 1024.0
      %v1680 = vmul.f32 1024.0, %v1679
      %v1681 = vsub.f32 1.0, %v1680
      %v1682 = vmul.f32 %v1679, %v1681
      %v1683 = vadd.f32 %v1679, %v1682
      %vm1684 = vweird.f32 %v1679
      %v1685 = vsel %vm1684, %v1679, %v1683
      %v1686 = vmul.f32 %v1070, %v1685
      %v1687 = vrcp.pop 256.0
      %v1688 = vmul.f32 256.0, %v1687
      %v1689 = vsub.f32 1.0, %v1688
      %v1690 = vmul.f32 %v1687, %v1689
      %v1691 = vadd.f32 %v1687, %v1690
      %vm1692 = vweird.f32 %v1687
      %v1693 = vsel %vm1692, %v1687, %v1691
      %v1694 = vmul.f32 %v1577, %v1693
      %v1695 = vadd.f32 %v1686, %v1694
      %v1696 = vsub.f32 %v1087, %v1678
      %v1697 = vrcp.pop 512.0
      %v1698 = vmul.f32 512.0, %v1697
      %v1699 = vsub.f32 1.0, %v1698
      %v1700 = vmul.f32 %v1697, %v1699
      %v1701 = vadd.f32 %v1697, %v1700
      %vm1702 = vweird.f32 %v1697
      %v1703 = vsel %vm1702, %v1697, %v1701
      %v1704 = vmul.f32 %v1696, %v1703
      %v1705 = vadd.f32 %v1695, %v1704
      %1706 = vst [vmem:[%s533] sm:$0xff] %v1705
      %p1707 = scmp.lt.s32.totalorder %s25, 1
      %s1708 = scalar_select %p1707, %s25, 1
      %s1709 = smul.addr %s1708, 8
      %s1710 = scalar_lea.vmem %s14, %s1709
      // Predicated region
      $region77: #{dan_forward_loss.1} parent=75 // pred_check
        %p1711 = pneg %p357
      $region78: #{dan_forward_loss.1} parent=75 // pred_check_branch
        %1713 = sbr.rel (%p1711) target = $region80
      $region79: #{dan_forward_loss.1} parent=75 // pred_region
        _
      $region80: #{dan_forward_loss.1} parent=75 // pred_fallthru
        _
    $region76: #{dan_forward_loss.1} parent=5 // pred_fallthru
      _
    %p1714 = scmp.le.s32.totalorder 2, %s20
    // Predicated region
    $region81: #{dan_forward_loss.1} parent=5 // pred_check
      %p1715 = pneg %p1714
    $region82: #{dan_forward_loss.1} parent=5 // pred_check_branch
      %1717 = sbr.rel (%p1715) target = $region84
    $region83: #{dan_forward_loss.1} parent=5 // pred_region
      %s1718 = ssub.s32 %s20, 2
      // Predicated region
      $region85: #{dan_forward_loss.1} parent=83 // pred_check
        %p1719 = pneg %p363
      $region86: #{dan_forward_loss.1} parent=83 // pred_check_branch
        %1721 = sbr.rel (%p1719) target = $region88
      $region87: #{dan_forward_loss.1} parent=83 // pred_region
        %p1722 = scmp.lt.s32.totalorder %s26, 1
        %s1723 = scalar_select %p1722, %s26, 1
        %s1724 = smul.addr %s1723, 8
        %s1725 = scalar_lea.vmem %s14, %s1724
      $region88: #{dan_forward_loss.1} parent=83 // pred_fallthru
        _
    $region84: #{dan_forward_loss.1} parent=5 // pred_fallthru
      _
  $region6: #{dan_forward_loss.1} parent=0 // loop_footer
    %s24 = sadd.s32 1, %s20
  $region7: #{dan_forward_loss.1} parent=0 // loop_footer_branch
    %19 = sbr.rel target = $region3
  $region8: #{dan_forward_loss.1} parent=0 // loop_exit
    _

</llo_original>
